<compile_context>
chip_gen: v6e
topology: v6e:2x2x1
jax: 0.10.0
libtpu: 0.0.40
codegen_flags: <defaults>
</compile_context>

<pallas_src>
import math

import jax
import jax.numpy as jnp
import numpy as np
from jax.experimental import pallas as pl
from jax.experimental.pallas import tpu as pltpu

LANE = 128  # TPU vreg lane width


def _round_up(n, m):
    return ((n + m - 1) // m) * m


def lstm_fc_kernel(x_ref, wih_ref, whh_ref, b_ref, wfc_ref, bfc_ref, out_ref):
    # x_ref:   (T*B, D)     time-major rows: row t*B + b == x[b, t, :]
    # wih_ref: (D,  4*GW)   per-gate 128-lane blocks [i | f | g | o]; real
    #                       weights in lanes [k*GW, k*GW+H) of block k, rest 0
    # whh_ref: (GW, 4*GW)   rows [0, H) hold W_hh^T per gate block, rest 0
    # b_ref:   (1,  4*GW)   b_ih + b_hh in the same per-gate block layout
    # wfc_ref: (GW, OP)     rows [0, H), cols [0, O) hold W_fc^T, rest 0
    # bfc_ref: (1,  OP)
    # out_ref: (B,  OP)     lane-dense (OP is a multiple of 128)
    TB = x_ref.shape[0]
    GW = wih_ref.shape[1] // 4          # per-gate lane block (multiple of 128)
    B = out_ref.shape[0]
    T = TB // B

    # (1) Hoisted input projection + bias for ALL timesteps: one MXU matmul,
    #     one bias broadcast (instead of T of each inside the recurrence).
    xg = (
        jnp.dot(x_ref[...], wih_ref[...], preferred_element_type=jnp.float32)
        + b_ref[...]
    )  # (T*B, 4*GW)

    whh = whh_ref[...]  # (GW, 4*GW); rows >= H are zero, killing padded lanes

    h = jnp.zeros((B, GW), jnp.float32)
    c = jnp.zeros((B, GW), jnp.float32)

    # (2) Fully unrolled static time loop (Python ints keep every slice static).
    for t in range(T):
        # Only this matmul + the elementwise update are on the serial chain.
        gates = xg[t * B:(t + 1) * B, :] + jnp.dot(
            h, whh, preferred_element_type=jnp.float32
        )  # (B, 4*GW)

        # (3) Vreg-boundary (128-lane) gate blocks: lane-aligned full-width
        #     elementwise math, no 32-lane sub-slices / cross-lane relayouts.
        #     Padded lanes carry exact zeros (zero weight columns/rows).
        i_g = jax.nn.sigmoid(gates[:, 0 * GW:1 * GW])
        f_g = jax.nn.sigmoid(gates[:, 1 * GW:2 * GW])
        g_g = jnp.tanh(gates[:, 2 * GW:3 * GW])
        o_g = jax.nn.sigmoid(gates[:, 3 * GW:4 * GW])
        c = f_g * c + i_g * g_g
        h = o_g * jnp.tanh(c)

    # (4) Lane-dense FC epilogue: 128-wide output slab; wrapper slices [:, :O].
    out = jnp.dot(h, wfc_ref[...], preferred_element_type=jnp.float32) + bfc_ref[...]
    out_ref[...] = out.astype(out_ref.dtype)


def unemployment_forecast_forward(x, params):
    """x: (B, T, input_size) float32, batch-first (PyTorch convention)."""
    w_ih, w_hh, b_ih, b_hh, w_fc, b_fc = (
        params["w_ih"], params["w_hh"], params["b_ih"],
        params["b_hh"], params["w_fc"], params["b_fc"],
    )
    B, T, D = x.shape
    H = w_hh.shape[1]
    O = w_fc.shape[0]
    GW = _round_up(H, LANE)   # per-gate lane block width
    OP = _round_up(O, LANE)   # lane-dense output width

    f32 = jnp.float32
    # Time-major, flattened rows: row t*B + b == x[b, t, :].
    x_tm = jnp.transpose(x, (1, 0, 2)).astype(f32).reshape(T * B, D)

    # Pack weights into per-gate 128-lane blocks (PyTorch gate order [i,f,g,o]).
    # In a real model this packing would be done once at load time.
    wih_wide = jnp.zeros((D, 4 * GW), f32)
    whh_wide = jnp.zeros((GW, 4 * GW), f32)
    b_wide = jnp.zeros((1, 4 * GW), f32)
    b_all = (b_ih + b_hh).astype(f32)
    for k in range(4):
        wih_wide = wih_wide.at[:, k * GW:k * GW + H].set(
            jnp.transpose(w_ih[k * H:(k + 1) * H, :]).astype(f32))
        whh_wide = whh_wide.at[:H, k * GW:k * GW + H].set(
            jnp.transpose(w_hh[k * H:(k + 1) * H, :]).astype(f32))
        b_wide = b_wide.at[0, k * GW:k * GW + H].set(b_all[k * H:(k + 1) * H])

    wfc_wide = jnp.zeros((GW, OP), f32).at[:H, :O].set(
        jnp.transpose(w_fc).astype(f32))
    bfc_wide = jnp.zeros((1, OP), f32).at[0, :O].set(b_fc.astype(f32))

    vmem = pl.BlockSpec(memory_space=pltpu.MemorySpace.VMEM)
    flops = (2 * T * B * D * 4 * GW        # hoisted input projection
             + T * 2 * B * GW * 4 * GW     # recurrent matmuls
             + T * 8 * B * GW              # gate / c / h elementwise
             + 2 * B * GW * OP)            # final FC
    transcendentals = T * 5 * B * GW
    bytes_accessed = 4 * (x_tm.size + wih_wide.size + whh_wide.size
                          + b_wide.size + wfc_wide.size + bfc_wide.size + B * OP)

    out = pl.pallas_call(
        lstm_fc_kernel,
        out_shape=jax.ShapeDtypeStruct((B, OP), f32),
        in_specs=[vmem] * 6,
        out_specs=vmem,
        cost_estimate=pl.CostEstimate(
            flops=flops,
            transcendentals=transcendentals,
            bytes_accessed=bytes_accessed,
        ),
    )(x_tm, wih_wide, whh_wide, b_wide, wfc_wide, bfc_wide)
    return out[:, :O]


def init_params(key, input_size, hidden_size, output_size):
    """Deterministic init mirroring PyTorch's U(-1/sqrt(H), 1/sqrt(H))."""
    ks = jax.random.split(key, 6)
    k_lstm = 1.0 / math.sqrt(hidden_size)
    k_fc = 1.0 / math.sqrt(hidden_size)
    u = lambda k, shape, bound: jax.random.uniform(
        k, shape, jnp.float32, minval=-bound, maxval=bound)
    return {
        "w_ih": u(ks[0], (4 * hidden_size, input_size), k_lstm),
        "w_hh": u(ks[1], (4 * hidden_size, hidden_size), k_lstm),
        "b_ih": u(ks[2], (4 * hidden_size,), k_lstm),
        "b_hh": u(ks[3], (4 * hidden_size,), k_lstm),
        "w_fc": u(ks[4], (output_size, hidden_size), k_fc),
        "b_fc": u(ks[5], (output_size,), k_fc),
    }


def reference_forward(x, params):
    """Pure-JAX reference of the PyTorch forward (for a sanity check)."""
    w_ih, w_hh, b_ih, b_hh = params["w_ih"], params["w_hh"], params["b_ih"], params["b_hh"]
    w_fc, b_fc = params["w_fc"], params["b_fc"]
    B, T, D = x.shape
    H = w_hh.shape[1]
    h = jnp.zeros((B, H), jnp.float32)
    c = jnp.zeros((B, H), jnp.float32)
    for t in range(T):
        g = x[:, t, :] @ w_ih.T + b_ih + h @ w_hh.T + b_hh
        i = jax.nn.sigmoid(g[:, 0 * H:1 * H])
        f = jax.nn.sigmoid(g[:, 1 * H:2 * H])
        gg = jnp.tanh(g[:, 2 * H:3 * H])
        o = jax.nn.sigmoid(g[:, 3 * H:4 * H])
        c = f * c + i * gg
        h = o * jnp.tanh(c)
    return h @ w_fc.T + b_fc


if __name__ == "__main__":
    B, T, INPUT_SIZE, HIDDEN_SIZE, OUTPUT_SIZE = 2, 8, 8, 32, 1

    key = jax.random.PRNGKey(0)
    k_x, k_p = jax.random.split(key)
    x = jax.random.normal(k_x, (B, T, INPUT_SIZE), jnp.float32)
    params = init_params(k_p, INPUT_SIZE, HIDDEN_SIZE, OUTPUT_SIZE)

    out = unemployment_forecast_forward(x, params)
    out = jax.block_until_ready(out)

    ref = reference_forward(x, params)
    assert out.shape == (B, OUTPUT_SIZE)
    np.testing.assert_allclose(np.asarray(out), np.asarray(ref), rtol=1e-5, atol=1e-5)

    print("KERNEL_OK")
</pallas_src>

<mosaic_0001>
module attributes {stable_mosaic.version = 11 : i64} {
  func.func @lstm_fc_kernel(%arg0: memref<16x8xf32, #tpu.memory_space<vmem>>, %arg1: memref<8x512xf32, #tpu.memory_space<vmem>>, %arg2: memref<128x512xf32, #tpu.memory_space<vmem>>, %arg3: memref<1x512xf32, #tpu.memory_space<vmem>>, %arg4: memref<128x128xf32, #tpu.memory_space<vmem>>, %arg5: memref<1x128xf32, #tpu.memory_space<vmem>>, %arg6: memref<2x128xf32, #tpu.memory_space<vmem>>) attributes {dimension_semantics = [], scalar_prefetch = 0 : i64, scratch_operands = 0 : i64, tpu.core_type = #tpu.core_type<tc>} {
    %c0 = arith.constant 0 : index
    %c0_0 = arith.constant 0 : index
    %0 = vector.load %arg0[%c0, %c0_0] : memref<16x8xf32, #tpu.memory_space<vmem>>, vector<16x8xf32>
    %c0_1 = arith.constant 0 : index
    %c0_2 = arith.constant 0 : index
    %1 = vector.load %arg1[%c0_1, %c0_2] : memref<8x512xf32, #tpu.memory_space<vmem>>, vector<8x512xf32>
    %cst = arith.constant dense<0.000000e+00> : vector<16x512xf32>
    %2 = tpu.matmul %0, %1, %cst {dimension_numbers = #tpu.dot_dimension_numbers<[1], [0], [0], [1], [0, 0, 1, 1], [], []>} : vector<16x8xf32>, vector<8x512xf32>, vector<16x512xf32> -> vector<16x512xf32>
    %c0_3 = arith.constant 0 : index
    %c0_4 = arith.constant 0 : index
    %3 = vector.load %arg3[%c0_3, %c0_4] : memref<1x512xf32, #tpu.memory_space<vmem>>, vector<1x512xf32>
    %4 = vector.broadcast %3 : vector<1x512xf32> to vector<16x512xf32>
    %5 = arith.addf %2, %4 : vector<16x512xf32>
    %c0_5 = arith.constant 0 : index
    %c0_6 = arith.constant 0 : index
    %6 = vector.load %arg2[%c0_5, %c0_6] : memref<128x512xf32, #tpu.memory_space<vmem>>, vector<128x512xf32>
    %cst_7 = arith.constant 0.000000e+00 : f32
    %7 = vector.broadcast %cst_7 : f32 to vector<2x128xf32>
    %cst_8 = arith.constant 0.000000e+00 : f32
    %8 = vector.broadcast %cst_8 : f32 to vector<2x128xf32>
    %9 = vector.extract_strided_slice %5 {offsets = [0, 0], sizes = [2, 512], strides = [1, 1]} : vector<16x512xf32> to vector<2x512xf32>
    %cst_9 = arith.constant dense<0.000000e+00> : vector<2x512xf32>
    %10 = tpu.matmul %7, %6, %cst_9 {dimension_numbers = #tpu.dot_dimension_numbers<[1], [0], [0], [1], [0, 0, 1, 1], [], []>} : vector<2x128xf32>, vector<128x512xf32>, vector<2x512xf32> -> vector<2x512xf32>
    %11 = arith.addf %9, %10 : vector<2x512xf32>
    %12 = vector.extract_strided_slice %11 {offsets = [0, 0], sizes = [2, 128], strides = [1, 1]} : vector<2x512xf32> to vector<2x128xf32>
    %13 = arith.negf %12 : vector<2x128xf32>
    %14 = math.exp %13 : vector<2x128xf32>
    %cst_10 = arith.constant 1.000000e+00 : f32
    %15 = vector.broadcast %cst_10 : f32 to vector<2x128xf32>
    %16 = arith.addf %15, %14 : vector<2x128xf32>
    %17 = arith.divf %15, %16 : vector<2x128xf32>
    %18 = vector.extract_strided_slice %11 {offsets = [0, 128], sizes = [2, 128], strides = [1, 1]} : vector<2x512xf32> to vector<2x128xf32>
    %19 = arith.negf %18 : vector<2x128xf32>
    %20 = math.exp %19 : vector<2x128xf32>
    %cst_11 = arith.constant 1.000000e+00 : f32
    %21 = vector.broadcast %cst_11 : f32 to vector<2x128xf32>
    %22 = arith.addf %21, %20 : vector<2x128xf32>
    %23 = arith.divf %21, %22 : vector<2x128xf32>
    %24 = vector.extract_strided_slice %11 {offsets = [0, 256], sizes = [2, 128], strides = [1, 1]} : vector<2x512xf32> to vector<2x128xf32>
    %25 = math.tanh %24 : vector<2x128xf32>
    %26 = vector.extract_strided_slice %11 {offsets = [0, 384], sizes = [2, 128], strides = [1, 1]} : vector<2x512xf32> to vector<2x128xf32>
    %27 = arith.negf %26 : vector<2x128xf32>
    %28 = math.exp %27 : vector<2x128xf32>
    %cst_12 = arith.constant 1.000000e+00 : f32
    %29 = vector.broadcast %cst_12 : f32 to vector<2x128xf32>
    %30 = arith.addf %29, %28 : vector<2x128xf32>
    %31 = arith.divf %29, %30 : vector<2x128xf32>
    %32 = arith.mulf %23, %8 : vector<2x128xf32>
    %33 = arith.mulf %17, %25 : vector<2x128xf32>
    %34 = arith.addf %32, %33 : vector<2x128xf32>
    %35 = math.tanh %34 : vector<2x128xf32>
    %36 = arith.mulf %31, %35 : vector<2x128xf32>
    %37 = vector.extract_strided_slice %5 {offsets = [2, 0], sizes = [2, 512], strides = [1, 1]} : vector<16x512xf32> to vector<2x512xf32>
    %cst_13 = arith.constant dense<0.000000e+00> : vector<2x512xf32>
    %38 = tpu.matmul %36, %6, %cst_13 {dimension_numbers = #tpu.dot_dimension_numbers<[1], [0], [0], [1], [0, 0, 1, 1], [], []>} : vector<2x128xf32>, vector<128x512xf32>, vector<2x512xf32> -> vector<2x512xf32>
    %39 = arith.addf %37, %38 : vector<2x512xf32>
    %40 = vector.extract_strided_slice %39 {offsets = [0, 0], sizes = [2, 128], strides = [1, 1]} : vector<2x512xf32> to vector<2x128xf32>
    %41 = arith.negf %40 : vector<2x128xf32>
    %42 = math.exp %41 : vector<2x128xf32>
    %cst_14 = arith.constant 1.000000e+00 : f32
    %43 = vector.broadcast %cst_14 : f32 to vector<2x128xf32>
    %44 = arith.addf %43, %42 : vector<2x128xf32>
    %45 = arith.divf %43, %44 : vector<2x128xf32>
    %46 = vector.extract_strided_slice %39 {offsets = [0, 128], sizes = [2, 128], strides = [1, 1]} : vector<2x512xf32> to vector<2x128xf32>
    %47 = arith.negf %46 : vector<2x128xf32>
    %48 = math.exp %47 : vector<2x128xf32>
    %cst_15 = arith.constant 1.000000e+00 : f32
    %49 = vector.broadcast %cst_15 : f32 to vector<2x128xf32>
    %50 = arith.addf %49, %48 : vector<2x128xf32>
    %51 = arith.divf %49, %50 : vector<2x128xf32>
    %52 = vector.extract_strided_slice %39 {offsets = [0, 256], sizes = [2, 128], strides = [1, 1]} : vector<2x512xf32> to vector<2x128xf32>
    %53 = math.tanh %52 : vector<2x128xf32>
    %54 = vector.extract_strided_slice %39 {offsets = [0, 384], sizes = [2, 128], strides = [1, 1]} : vector<2x512xf32> to vector<2x128xf32>
    %55 = arith.negf %54 : vector<2x128xf32>
    %56 = math.exp %55 : vector<2x128xf32>
    %cst_16 = arith.constant 1.000000e+00 : f32
    %57 = vector.broadcast %cst_16 : f32 to vector<2x128xf32>
    %58 = arith.addf %57, %56 : vector<2x128xf32>
    %59 = arith.divf %57, %58 : vector<2x128xf32>
    %60 = arith.mulf %51, %34 : vector<2x128xf32>
    %61 = arith.mulf %45, %53 : vector<2x128xf32>
    %62 = arith.addf %60, %61 : vector<2x128xf32>
    %63 = math.tanh %62 : vector<2x128xf32>
    %64 = arith.mulf %59, %63 : vector<2x128xf32>
    %65 = vector.extract_strided_slice %5 {offsets = [4, 0], sizes = [2, 512], strides = [1, 1]} : vector<16x512xf32> to vector<2x512xf32>
    %cst_17 = arith.constant dense<0.000000e+00> : vector<2x512xf32>
    %66 = tpu.matmul %64, %6, %cst_17 {dimension_numbers = #tpu.dot_dimension_numbers<[1], [0], [0], [1], [0, 0, 1, 1], [], []>} : vector<2x128xf32>, vector<128x512xf32>, vector<2x512xf32> -> vector<2x512xf32>
    %67 = arith.addf %65, %66 : vector<2x512xf32>
    %68 = vector.extract_strided_slice %67 {offsets = [0, 0], sizes = [2, 128], strides = [1, 1]} : vector<2x512xf32> to vector<2x128xf32>
    %69 = arith.negf %68 : vector<2x128xf32>
    %70 = math.exp %69 : vector<2x128xf32>
    %cst_18 = arith.constant 1.000000e+00 : f32
    %71 = vector.broadcast %cst_18 : f32 to vector<2x128xf32>
    %72 = arith.addf %71, %70 : vector<2x128xf32>
    %73 = arith.divf %71, %72 : vector<2x128xf32>
    %74 = vector.extract_strided_slice %67 {offsets = [0, 128], sizes = [2, 128], strides = [1, 1]} : vector<2x512xf32> to vector<2x128xf32>
    %75 = arith.negf %74 : vector<2x128xf32>
    %76 = math.exp %75 : vector<2x128xf32>
    %cst_19 = arith.constant 1.000000e+00 : f32
    %77 = vector.broadcast %cst_19 : f32 to vector<2x128xf32>
    %78 = arith.addf %77, %76 : vector<2x128xf32>
    %79 = arith.divf %77, %78 : vector<2x128xf32>
    %80 = vector.extract_strided_slice %67 {offsets = [0, 256], sizes = [2, 128], strides = [1, 1]} : vector<2x512xf32> to vector<2x128xf32>
    %81 = math.tanh %80 : vector<2x128xf32>
    %82 = vector.extract_strided_slice %67 {offsets = [0, 384], sizes = [2, 128], strides = [1, 1]} : vector<2x512xf32> to vector<2x128xf32>
    %83 = arith.negf %82 : vector<2x128xf32>
    %84 = math.exp %83 : vector<2x128xf32>
    %cst_20 = arith.constant 1.000000e+00 : f32
    %85 = vector.broadcast %cst_20 : f32 to vector<2x128xf32>
    %86 = arith.addf %85, %84 : vector<2x128xf32>
    %87 = arith.divf %85, %86 : vector<2x128xf32>
    %88 = arith.mulf %79, %62 : vector<2x128xf32>
    %89 = arith.mulf %73, %81 : vector<2x128xf32>
    %90 = arith.addf %88, %89 : vector<2x128xf32>
    %91 = math.tanh %90 : vector<2x128xf32>
    %92 = arith.mulf %87, %91 : vector<2x128xf32>
    %93 = vector.extract_strided_slice %5 {offsets = [6, 0], sizes = [2, 512], strides = [1, 1]} : vector<16x512xf32> to vector<2x512xf32>
    %cst_21 = arith.constant dense<0.000000e+00> : vector<2x512xf32>
    %94 = tpu.matmul %92, %6, %cst_21 {dimension_numbers = #tpu.dot_dimension_numbers<[1], [0], [0], [1], [0, 0, 1, 1], [], []>} : vector<2x128xf32>, vector<128x512xf32>, vector<2x512xf32> -> vector<2x512xf32>
    %95 = arith.addf %93, %94 : vector<2x512xf32>
    %96 = vector.extract_strided_slice %95 {offsets = [0, 0], sizes = [2, 128], strides = [1, 1]} : vector<2x512xf32> to vector<2x128xf32>
    %97 = arith.negf %96 : vector<2x128xf32>
    %98 = math.exp %97 : vector<2x128xf32>
    %cst_22 = arith.constant 1.000000e+00 : f32
    %99 = vector.broadcast %cst_22 : f32 to vector<2x128xf32>
    %100 = arith.addf %99, %98 : vector<2x128xf32>
    %101 = arith.divf %99, %100 : vector<2x128xf32>
    %102 = vector.extract_strided_slice %95 {offsets = [0, 128], sizes = [2, 128], strides = [1, 1]} : vector<2x512xf32> to vector<2x128xf32>
    %103 = arith.negf %102 : vector<2x128xf32>
    %104 = math.exp %103 : vector<2x128xf32>
    %cst_23 = arith.constant 1.000000e+00 : f32
    %105 = vector.broadcast %cst_23 : f32 to vector<2x128xf32>
    %106 = arith.addf %105, %104 : vector<2x128xf32>
    %107 = arith.divf %105, %106 : vector<2x128xf32>
    %108 = vector.extract_strided_slice %95 {offsets = [0, 256], sizes = [2, 128], strides = [1, 1]} : vector<2x512xf32> to vector<2x128xf32>
    %109 = math.tanh %108 : vector<2x128xf32>
    %110 = vector.extract_strided_slice %95 {offsets = [0, 384], sizes = [2, 128], strides = [1, 1]} : vector<2x512xf32> to vector<2x128xf32>
    %111 = arith.negf %110 : vector<2x128xf32>
    %112 = math.exp %111 : vector<2x128xf32>
    %cst_24 = arith.constant 1.000000e+00 : f32
    %113 = vector.broadcast %cst_24 : f32 to vector<2x128xf32>
    %114 = arith.addf %113, %112 : vector<2x128xf32>
    %115 = arith.divf %113, %114 : vector<2x128xf32>
    %116 = arith.mulf %107, %90 : vector<2x128xf32>
    %117 = arith.mulf %101, %109 : vector<2x128xf32>
    %118 = arith.addf %116, %117 : vector<2x128xf32>
    %119 = math.tanh %118 : vector<2x128xf32>
    %120 = arith.mulf %115, %119 : vector<2x128xf32>
    %121 = vector.extract_strided_slice %5 {offsets = [8, 0], sizes = [2, 512], strides = [1, 1]} : vector<16x512xf32> to vector<2x512xf32>
    %cst_25 = arith.constant dense<0.000000e+00> : vector<2x512xf32>
    %122 = tpu.matmul %120, %6, %cst_25 {dimension_numbers = #tpu.dot_dimension_numbers<[1], [0], [0], [1], [0, 0, 1, 1], [], []>} : vector<2x128xf32>, vector<128x512xf32>, vector<2x512xf32> -> vector<2x512xf32>
    %123 = arith.addf %121, %122 : vector<2x512xf32>
    %124 = vector.extract_strided_slice %123 {offsets = [0, 0], sizes = [2, 128], strides = [1, 1]} : vector<2x512xf32> to vector<2x128xf32>
    %125 = arith.negf %124 : vector<2x128xf32>
    %126 = math.exp %125 : vector<2x128xf32>
    %cst_26 = arith.constant 1.000000e+00 : f32
    %127 = vector.broadcast %cst_26 : f32 to vector<2x128xf32>
    %128 = arith.addf %127, %126 : vector<2x128xf32>
    %129 = arith.divf %127, %128 : vector<2x128xf32>
    %130 = vector.extract_strided_slice %123 {offsets = [0, 128], sizes = [2, 128], strides = [1, 1]} : vector<2x512xf32> to vector<2x128xf32>
    %131 = arith.negf %130 : vector<2x128xf32>
    %132 = math.exp %131 : vector<2x128xf32>
    %cst_27 = arith.constant 1.000000e+00 : f32
    %133 = vector.broadcast %cst_27 : f32 to vector<2x128xf32>
    %134 = arith.addf %133, %132 : vector<2x128xf32>
    %135 = arith.divf %133, %134 : vector<2x128xf32>
    %136 = vector.extract_strided_slice %123 {offsets = [0, 256], sizes = [2, 128], strides = [1, 1]} : vector<2x512xf32> to vector<2x128xf32>
    %137 = math.tanh %136 : vector<2x128xf32>
    %138 = vector.extract_strided_slice %123 {offsets = [0, 384], sizes = [2, 128], strides = [1, 1]} : vector<2x512xf32> to vector<2x128xf32>
    %139 = arith.negf %138 : vector<2x128xf32>
    %140 = math.exp %139 : vector<2x128xf32>
    %cst_28 = arith.constant 1.000000e+00 : f32
    %141 = vector.broadcast %cst_28 : f32 to vector<2x128xf32>
    %142 = arith.addf %141, %140 : vector<2x128xf32>
    %143 = arith.divf %141, %142 : vector<2x128xf32>
    %144 = arith.mulf %135, %118 : vector<2x128xf32>
    %145 = arith.mulf %129, %137 : vector<2x128xf32>
    %146 = arith.addf %144, %145 : vector<2x128xf32>
    %147 = math.tanh %146 : vector<2x128xf32>
    %148 = arith.mulf %143, %147 : vector<2x128xf32>
    %149 = vector.extract_strided_slice %5 {offsets = [10, 0], sizes = [2, 512], strides = [1, 1]} : vector<16x512xf32> to vector<2x512xf32>
    %cst_29 = arith.constant dense<0.000000e+00> : vector<2x512xf32>
    %150 = tpu.matmul %148, %6, %cst_29 {dimension_numbers = #tpu.dot_dimension_numbers<[1], [0], [0], [1], [0, 0, 1, 1], [], []>} : vector<2x128xf32>, vector<128x512xf32>, vector<2x512xf32> -> vector<2x512xf32>
    %151 = arith.addf %149, %150 : vector<2x512xf32>
    %152 = vector.extract_strided_slice %151 {offsets = [0, 0], sizes = [2, 128], strides = [1, 1]} : vector<2x512xf32> to vector<2x128xf32>
    %153 = arith.negf %152 : vector<2x128xf32>
    %154 = math.exp %153 : vector<2x128xf32>
    %cst_30 = arith.constant 1.000000e+00 : f32
    %155 = vector.broadcast %cst_30 : f32 to vector<2x128xf32>
    %156 = arith.addf %155, %154 : vector<2x128xf32>
    %157 = arith.divf %155, %156 : vector<2x128xf32>
    %158 = vector.extract_strided_slice %151 {offsets = [0, 128], sizes = [2, 128], strides = [1, 1]} : vector<2x512xf32> to vector<2x128xf32>
    %159 = arith.negf %158 : vector<2x128xf32>
    %160 = math.exp %159 : vector<2x128xf32>
    %cst_31 = arith.constant 1.000000e+00 : f32
    %161 = vector.broadcast %cst_31 : f32 to vector<2x128xf32>
    %162 = arith.addf %161, %160 : vector<2x128xf32>
    %163 = arith.divf %161, %162 : vector<2x128xf32>
    %164 = vector.extract_strided_slice %151 {offsets = [0, 256], sizes = [2, 128], strides = [1, 1]} : vector<2x512xf32> to vector<2x128xf32>
    %165 = math.tanh %164 : vector<2x128xf32>
    %166 = vector.extract_strided_slice %151 {offsets = [0, 384], sizes = [2, 128], strides = [1, 1]} : vector<2x512xf32> to vector<2x128xf32>
    %167 = arith.negf %166 : vector<2x128xf32>
    %168 = math.exp %167 : vector<2x128xf32>
    %cst_32 = arith.constant 1.000000e+00 : f32
    %169 = vector.broadcast %cst_32 : f32 to vector<2x128xf32>
    %170 = arith.addf %169, %168 : vector<2x128xf32>
    %171 = arith.divf %169, %170 : vector<2x128xf32>
    %172 = arith.mulf %163, %146 : vector<2x128xf32>
    %173 = arith.mulf %157, %165 : vector<2x128xf32>
    %174 = arith.addf %172, %173 : vector<2x128xf32>
    %175 = math.tanh %174 : vector<2x128xf32>
    %176 = arith.mulf %171, %175 : vector<2x128xf32>
    %177 = vector.extract_strided_slice %5 {offsets = [12, 0], sizes = [2, 512], strides = [1, 1]} : vector<16x512xf32> to vector<2x512xf32>
    %cst_33 = arith.constant dense<0.000000e+00> : vector<2x512xf32>
    %178 = tpu.matmul %176, %6, %cst_33 {dimension_numbers = #tpu.dot_dimension_numbers<[1], [0], [0], [1], [0, 0, 1, 1], [], []>} : vector<2x128xf32>, vector<128x512xf32>, vector<2x512xf32> -> vector<2x512xf32>
    %179 = arith.addf %177, %178 : vector<2x512xf32>
    %180 = vector.extract_strided_slice %179 {offsets = [0, 0], sizes = [2, 128], strides = [1, 1]} : vector<2x512xf32> to vector<2x128xf32>
    %181 = arith.negf %180 : vector<2x128xf32>
    %182 = math.exp %181 : vector<2x128xf32>
    %cst_34 = arith.constant 1.000000e+00 : f32
    %183 = vector.broadcast %cst_34 : f32 to vector<2x128xf32>
    %184 = arith.addf %183, %182 : vector<2x128xf32>
    %185 = arith.divf %183, %184 : vector<2x128xf32>
    %186 = vector.extract_strided_slice %179 {offsets = [0, 128], sizes = [2, 128], strides = [1, 1]} : vector<2x512xf32> to vector<2x128xf32>
    %187 = arith.negf %186 : vector<2x128xf32>
    %188 = math.exp %187 : vector<2x128xf32>
    %cst_35 = arith.constant 1.000000e+00 : f32
    %189 = vector.broadcast %cst_35 : f32 to vector<2x128xf32>
    %190 = arith.addf %189, %188 : vector<2x128xf32>
    %191 = arith.divf %189, %190 : vector<2x128xf32>
    %192 = vector.extract_strided_slice %179 {offsets = [0, 256], sizes = [2, 128], strides = [1, 1]} : vector<2x512xf32> to vector<2x128xf32>
    %193 = math.tanh %192 : vector<2x128xf32>
    %194 = vector.extract_strided_slice %179 {offsets = [0, 384], sizes = [2, 128], strides = [1, 1]} : vector<2x512xf32> to vector<2x128xf32>
    %195 = arith.negf %194 : vector<2x128xf32>
    %196 = math.exp %195 : vector<2x128xf32>
    %cst_36 = arith.constant 1.000000e+00 : f32
    %197 = vector.broadcast %cst_36 : f32 to vector<2x128xf32>
    %198 = arith.addf %197, %196 : vector<2x128xf32>
    %199 = arith.divf %197, %198 : vector<2x128xf32>
    %200 = arith.mulf %191, %174 : vector<2x128xf32>
    %201 = arith.mulf %185, %193 : vector<2x128xf32>
    %202 = arith.addf %200, %201 : vector<2x128xf32>
    %203 = math.tanh %202 : vector<2x128xf32>
    %204 = arith.mulf %199, %203 : vector<2x128xf32>
    %205 = vector.extract_strided_slice %5 {offsets = [14, 0], sizes = [2, 512], strides = [1, 1]} : vector<16x512xf32> to vector<2x512xf32>
    %cst_37 = arith.constant dense<0.000000e+00> : vector<2x512xf32>
    %206 = tpu.matmul %204, %6, %cst_37 {dimension_numbers = #tpu.dot_dimension_numbers<[1], [0], [0], [1], [0, 0, 1, 1], [], []>} : vector<2x128xf32>, vector<128x512xf32>, vector<2x512xf32> -> vector<2x512xf32>
    %207 = arith.addf %205, %206 : vector<2x512xf32>
    %208 = vector.extract_strided_slice %207 {offsets = [0, 0], sizes = [2, 128], strides = [1, 1]} : vector<2x512xf32> to vector<2x128xf32>
    %209 = arith.negf %208 : vector<2x128xf32>
    %210 = math.exp %209 : vector<2x128xf32>
    %cst_38 = arith.constant 1.000000e+00 : f32
    %211 = vector.broadcast %cst_38 : f32 to vector<2x128xf32>
    %212 = arith.addf %211, %210 : vector<2x128xf32>
    %213 = arith.divf %211, %212 : vector<2x128xf32>
    %214 = vector.extract_strided_slice %207 {offsets = [0, 128], sizes = [2, 128], strides = [1, 1]} : vector<2x512xf32> to vector<2x128xf32>
    %215 = arith.negf %214 : vector<2x128xf32>
    %216 = math.exp %215 : vector<2x128xf32>
    %cst_39 = arith.constant 1.000000e+00 : f32
    %217 = vector.broadcast %cst_39 : f32 to vector<2x128xf32>
    %218 = arith.addf %217, %216 : vector<2x128xf32>
    %219 = arith.divf %217, %218 : vector<2x128xf32>
    %220 = vector.extract_strided_slice %207 {offsets = [0, 256], sizes = [2, 128], strides = [1, 1]} : vector<2x512xf32> to vector<2x128xf32>
    %221 = math.tanh %220 : vector<2x128xf32>
    %222 = vector.extract_strided_slice %207 {offsets = [0, 384], sizes = [2, 128], strides = [1, 1]} : vector<2x512xf32> to vector<2x128xf32>
    %223 = arith.negf %222 : vector<2x128xf32>
    %224 = math.exp %223 : vector<2x128xf32>
    %cst_40 = arith.constant 1.000000e+00 : f32
    %225 = vector.broadcast %cst_40 : f32 to vector<2x128xf32>
    %226 = arith.addf %225, %224 : vector<2x128xf32>
    %227 = arith.divf %225, %226 : vector<2x128xf32>
    %228 = arith.mulf %219, %202 : vector<2x128xf32>
    %229 = arith.mulf %213, %221 : vector<2x128xf32>
    %230 = arith.addf %228, %229 : vector<2x128xf32>
    %231 = math.tanh %230 : vector<2x128xf32>
    %232 = arith.mulf %227, %231 : vector<2x128xf32>
    %c0_41 = arith.constant 0 : index
    %c0_42 = arith.constant 0 : index
    %233 = vector.load %arg4[%c0_41, %c0_42] : memref<128x128xf32, #tpu.memory_space<vmem>>, vector<128x128xf32>
    %cst_43 = arith.constant dense<0.000000e+00> : vector<2x128xf32>
    %234 = tpu.matmul %232, %233, %cst_43 {dimension_numbers = #tpu.dot_dimension_numbers<[1], [0], [0], [1], [0, 0, 1, 1], [], []>} : vector<2x128xf32>, vector<128x128xf32>, vector<2x128xf32> -> vector<2x128xf32>
    %c0_44 = arith.constant 0 : index
    %c0_45 = arith.constant 0 : index
    %235 = vector.load %arg5[%c0_44, %c0_45] : memref<1x128xf32, #tpu.memory_space<vmem>>, vector<1x128xf32>
    %236 = vector.broadcast %235 : vector<1x128xf32> to vector<2x128xf32>
    %237 = arith.addf %234, %236 : vector<2x128xf32>
    %c0_46 = arith.constant 0 : index
    %c0_47 = arith.constant 0 : index
    %238 = vector.load %arg6[%c0_46, %c0_47] : memref<2x128xf32, #tpu.memory_space<vmem>>, vector<2x128xf32>
    tpu.vector_store %arg6[%c0_46, %c0_47], %237 {strides = array<i32>} : memref<2x128xf32, #tpu.memory_space<vmem>>, vector<2x128xf32>,
    return
  }
}

</mosaic_0001>

<llo_original>
// kernel: tpu_custom_call.1
$region0: #{tpu_custom_call.1}
  #allocation0 [shape = 'u32[]', space=smem, size = 0x4, offset = 0x4, fixed_abs, tag = 'smem constant byte address 0x4 - core index']
  #allocation1 [shape = 'u32[144,128]{1,0:T(1,128)}', space=vmem, size = 0x12000, scoped, tag = 'internal scratch']
  %s0 = inlined_call_operand.vmem [shape: f32[16,8], index: 0, kind: input, shape index: {}]
  %s1 = inlined_call_operand.hbm [shape: f32[8,512], index: 1, kind: input, shape index: {}]
  %s2 = inlined_call_operand.hbm [shape: f32[128,512], index: 2, kind: input, shape index: {}]
  %s3 = inlined_call_operand.vmem [shape: f32[1,512], index: 3, kind: input, shape index: {}]
  %s4 = inlined_call_operand.hbm [shape: f32[128,128], index: 4, kind: input, shape index: {}]
  %s5 = inlined_call_operand.vmem [shape: f32[1,128], index: 5, kind: input, shape index: {}]
  %s6 = inlined_call_operand.hbm [shape: f32[2,128], index: 6, kind: output, shape index: {}]
  %s7 = sld [smem:[#allocation0]]
  $region46: #{tpu_custom_call.1} parent=0
    _
  %s9 = ssub.s32 1, %s7
  %s10 = scalar_select 0, %s9, %s7
  $region1: #{tpu_custom_call.1} parent=0
    #allocation2 [shape = 'u8[16384]{0}', space=vmem, size = 0x4000, scoped, tag = 'input window, operand 1, single buffered']
    #allocation3 [shape = 's32[1]{0}', space=sflag, size = 0x4, scoped, tag = 'scoped memory for tpu_custom_call.1']
    #allocation4 [shape = 's32[1]{0}', space=sflag, size = 0x4, scoped, tag = 'scoped memory for tpu_custom_call.1']
    #allocation5 [shape = 'u8[262144]{0}', space=vmem, size = 0x40000, scoped, tag = 'input window, operand 2, single buffered']
    #allocation6 [shape = 's32[1]{0}', space=sflag, size = 0x4, scoped, tag = 'scoped memory for tpu_custom_call.1']
    #allocation7 [shape = 'u8[65536]{0}', space=vmem, size = 0x10000, scoped, tag = 'input window, operand 4, single buffered']
    #allocation8 [shape = 'u8[1024]{0}', space=vmem, size = 0x400, scoped, tag = 'output window, operand 0, single buffered']
    %11 = vsyncpa [#allocation3], 0
    %12 = vsyncpa [#allocation6], 0
    %13 = vsyncpa [#allocation4], 0
    // Predicated region
    $region2: #{tpu_custom_call.1} parent=1 // pred_check
      _
    $region3: #{tpu_custom_call.1} parent=1 // pred_check_branch
      %15 = sbr.rel (0) target = $region5
    $region4: #{tpu_custom_call.1} parent=1 // pred_region
      _
    $region5: #{tpu_custom_call.1} parent=1 // pred_fallthru
      _
    // Predicated region
    $region6: #{tpu_custom_call.1} parent=1 // pred_check
      _
    $region7: #{tpu_custom_call.1} parent=1 // pred_check_branch
      %17 = sbr.rel (0) target = $region9
    $region8: #{tpu_custom_call.1} parent=1 // pred_region
      %s19 = ssub.s32 512, 512
      %20 = vsyncadd [#allocation3], %s19
      %s22 = sshll.u32 [#allocation2], 4
      %s23 = int_to_ptr.vmem [resolvable:$true] %s22
      %25 = dma.hbm_to_vmem [thread:$0]  %s1, 512, %s23, [#allocation3]
    $region9: #{tpu_custom_call.1} parent=1 // pred_fallthru
      _
    // Predicated region
    $region10: #{tpu_custom_call.1} parent=1 // pred_check
      _
    $region11: #{tpu_custom_call.1} parent=1 // pred_check_branch
      %27 = sbr.rel (0) target = $region13
    $region12: #{tpu_custom_call.1} parent=1 // pred_region
      %s29 = ssub.s32 8192, 8192
      %30 = vsyncadd [#allocation6], %s29
      %s31 = sshll.u32 [#allocation5], 4
      %s32 = int_to_ptr.vmem [resolvable:$true] %s31
      %37 = dma.hbm_to_vmem [thread:$0]  %s2, 8192, %s32, [#allocation6], 512, 512, 32
    $region13: #{tpu_custom_call.1} parent=1 // pred_fallthru
      _
    // Predicated region
    $region14: #{tpu_custom_call.1} parent=1 // pred_check
      _
    $region15: #{tpu_custom_call.1} parent=1 // pred_check_branch
      %39 = sbr.rel (0) target = $region17
    $region16: #{tpu_custom_call.1} parent=1 // pred_region
      _
    $region17: #{tpu_custom_call.1} parent=1 // pred_fallthru
      _
    // Predicated region
    $region18: #{tpu_custom_call.1} parent=1 // pred_check
      _
    $region19: #{tpu_custom_call.1} parent=1 // pred_check_branch
      %41 = sbr.rel (0) target = $region21
    $region20: #{tpu_custom_call.1} parent=1 // pred_region
      %s43 = ssub.s32 2048, 2048
      %44 = vsyncadd [#allocation6], %s43
      %s45 = sshll.u32 [#allocation7], 4
      %s46 = int_to_ptr.vmem [resolvable:$true] %s45
      %51 = dma.hbm_to_vmem [thread:$0]  %s4, 2048, %s46, [#allocation6], 128, 128, 8
    $region21: #{tpu_custom_call.1} parent=1 // pred_fallthru
      _
    // Predicated region
    $region22: #{tpu_custom_call.1} parent=1 // pred_check
      _
    $region23: #{tpu_custom_call.1} parent=1 // pred_check_branch
      %53 = sbr.rel (0) target = $region25
    $region24: #{tpu_custom_call.1} parent=1 // pred_region
      _
    $region25: #{tpu_custom_call.1} parent=1 // pred_fallthru
      _
    // Predicated region
    $region26: #{tpu_custom_call.1} parent=1 // pred_check
      _
    $region27: #{tpu_custom_call.1} parent=1 // pred_check_branch
      %55 = sbr.rel (0) target = $region29
    $region28: #{tpu_custom_call.1} parent=1 // pred_region
      %56 = dma.done [#allocation3], 512
    $region29: #{tpu_custom_call.1} parent=1 // pred_fallthru
      _
    // Predicated region
    $region30: #{tpu_custom_call.1} parent=1 // pred_check
      _
    $region31: #{tpu_custom_call.1} parent=1 // pred_check_branch
      %58 = sbr.rel (0) target = $region33
    $region32: #{tpu_custom_call.1} parent=1 // pred_region
      %59 = dma.done [#allocation6], 8192
    $region33: #{tpu_custom_call.1} parent=1 // pred_fallthru
      _
    // Predicated region
    $region34: #{tpu_custom_call.1} parent=1 // pred_check
      _
    $region35: #{tpu_custom_call.1} parent=1 // pred_check_branch
      %61 = sbr.rel (0) target = $region37
    $region36: #{tpu_custom_call.1} parent=1 // pred_region
      %62 = dma.done [#allocation6], 2048
    $region37: #{tpu_custom_call.1} parent=1 // pred_fallthru
      _
    %v63 = vld [vmem:[%s0] sm:$0xff]
    %v64 = vld [vmem:[%s0 + $0x8] sm:$0xff]
    %v65 = vld [vmem:[#allocation2] sm:$0xff]
    %v66 = vld [vmem:[#allocation2 + $0x8] sm:$0xff]
    %v67 = vld [vmem:[#allocation2 + $0x10] sm:$0xff]
    %v68 = vld [vmem:[#allocation2 + $0x18] sm:$0xff]
    %v69 = vld [vmem:[%s3] sm:$0xf]
    %v71 = vlaneseq
    %v72 = vshrl.u32 %v71, 7
    %v73 = vsub.s32 0, %v72
    %v74 = vrot.slane %v69, %v73
    %v75 = vlaneseq
    %v76 = vshrl.u32 %v75, 7
    %v77 = vsub.s32 1, %v76
    %v78 = vrot.slane %v69, %v77
    %v79 = vlaneseq
    %v80 = vshrl.u32 %v79, 7
    %v81 = vsub.s32 2, %v80
    %v82 = vrot.slane %v69, %v81
    %v83 = vlaneseq
    %v84 = vshrl.u32 %v83, 7
    %v85 = vsub.s32 3, %v84
    %v86 = vrot.slane %v69, %v85
    %vm91 = vcmask 64512
    %v93 = vsel %vm91, %v63, 0
    %v96 = vsel %vm91, %v64, 0
    %98 = vmatprep.subr.mxu0 0.0
    %99 = vmatpush1.msra.mxu0 0.0
    %100 = vmatprep.subr.mxu0 0.0
    %101 = vmatpush1.msra.mxu0 0.0
    %102 = vmatprep.subr.mxu0 0.0
    %103 = vmatpush1.msra.mxu0 0.0
    %104 = vmatprep.subr.mxu0 0.0
    %105 = vmatpush1.msra.mxu0 0.0
    %106 = vmatprep.subr.mxu0 0.0
    %107 = vmatpush1.msra.mxu0 0.0
    %108 = vmatprep.subr.mxu0 0.0
    %109 = vmatpush1.msra.mxu0 0.0
    %110 = vmatprep.subr.mxu0 0.0
    %111 = vmatpush1.msra.mxu0 0.0
    %112 = vmatprep.subr.mxu0 0.0
    %113 = vmatpush1.msra.mxu0 0.0
    %114 = vmatprep.subr.mxu0 0.0
    %115 = vmatpush1.msra.mxu0 0.0
    %116 = vmatprep.subr.mxu0 0.0
    %117 = vmatpush1.msra.mxu0 0.0
    %118 = vmatprep.subr.mxu0 0.0
    %119 = vmatpush1.msra.mxu0 0.0
    %120 = vmatprep.subr.mxu0 0.0
    %121 = vmatpush1.msra.mxu0 0.0
    %122 = vmatprep.subr.mxu0 0.0
    %123 = vmatpush1.msra.mxu0 0.0
    %124 = vmatprep.subr.mxu0 0.0
    %125 = vmatpush1.msra.mxu0 0.0
    %126 = vmatprep.subr.mxu0 0.0
    %127 = vmatpush1.msra.mxu0 0.0
    %128 = vmatprep.subr.mxu0 %v66
    %129 = vmatpush1.msra.mxu0 %v65
    %130 = vmatprep.subr.mxu0 0.0
    %131 = vmatpush2.msra.mxu0 0.0
    %132 = vmatprep.subr.mxu0 0.0
    %133 = vmatpush2.msra.mxu0 0.0
    %134 = vmatprep.subr.mxu0 0.0
    %135 = vmatpush2.msra.mxu0 0.0
    %136 = vmatprep.subr.mxu0 0.0
    %137 = vmatpush2.msra.mxu0 0.0
    %138 = vmatprep.subr.mxu0 0.0
    %139 = vmatpush2.msra.mxu0 0.0
    %140 = vmatprep.subr.mxu0 0.0
    %141 = vmatpush2.msra.mxu0 0.0
    %142 = vmatprep.subr.mxu0 0.0
    %143 = vmatpush2.msra.mxu0 0.0
    %144 = vmatprep.subr.mxu0 0.0
    %145 = vmatpush2.msra.mxu0 0.0
    %146 = vmatprep.subr.mxu0 0.0
    %147 = vmatpush2.msra.mxu0 0.0
    %148 = vmatprep.subr.mxu0 0.0
    %149 = vmatpush2.msra.mxu0 0.0
    %150 = vmatprep.subr.mxu0 0.0
    %151 = vmatpush2.msra.mxu0 0.0
    %152 = vmatprep.subr.mxu0 0.0
    %153 = vmatpush2.msra.mxu0 0.0
    %154 = vmatprep.subr.mxu0 0.0
    %155 = vmatpush2.msra.mxu0 0.0
    %156 = vmatprep.subr.mxu0 0.0
    %157 = vmatpush2.msra.mxu0 0.0
    %158 = vmatprep.subr.mxu0 0.0
    %159 = vmatpush2.msra.mxu0 0.0
    %160 = vmatprep.subr.mxu0 0.0
    %161 = vmatpush2.msra.mxu0 0.0
    %162 = vmatprep.mubr.f32.mxu0 0.0
    %163 = vmatmul.mubr.f32.gmra.mxu0 %v93
    %v164 = vpop.f32.mrf.mxu0
    %v165 = vadd.f32 %v74, %v164
    %v166 = vpop.f32.mrf.mxu0
    %v167 = vadd.f32 %v78, %v166
    %168 = vmatprep.mubr.f32.mxu0 0.0
    %169 = vmatmul.mubr.f32.gmra.mxu0 %v96
    %v170 = vpop.f32.mrf.mxu0
    %v171 = vadd.f32 %v74, %v170
    %v172 = vpop.f32.mrf.mxu0
    %v173 = vadd.f32 %v78, %v172
    %174 = vdwg.mxu0
    %175 = vmatprep.subr.mxu0 0.0
    %176 = vmatpush1.msra.mxu0 0.0
    %177 = vmatprep.subr.mxu0 0.0
    %178 = vmatpush1.msra.mxu0 0.0
    %179 = vmatprep.subr.mxu0 0.0
    %180 = vmatpush1.msra.mxu0 0.0
    %181 = vmatprep.subr.mxu0 0.0
    %182 = vmatpush1.msra.mxu0 0.0
    %183 = vmatprep.subr.mxu0 0.0
    %184 = vmatpush1.msra.mxu0 0.0
    %185 = vmatprep.subr.mxu0 0.0
    %186 = vmatpush1.msra.mxu0 0.0
    %187 = vmatprep.subr.mxu0 0.0
    %188 = vmatpush1.msra.mxu0 0.0
    %189 = vmatprep.subr.mxu0 0.0
    %190 = vmatpush1.msra.mxu0 0.0
    %191 = vmatprep.subr.mxu0 0.0
    %192 = vmatpush1.msra.mxu0 0.0
    %193 = vmatprep.subr.mxu0 0.0
    %194 = vmatpush1.msra.mxu0 0.0
    %195 = vmatprep.subr.mxu0 0.0
    %196 = vmatpush1.msra.mxu0 0.0
    %197 = vmatprep.subr.mxu0 0.0
    %198 = vmatpush1.msra.mxu0 0.0
    %199 = vmatprep.subr.mxu0 0.0
    %200 = vmatpush1.msra.mxu0 0.0
    %201 = vmatprep.subr.mxu0 0.0
    %202 = vmatpush1.msra.mxu0 0.0
    %203 = vmatprep.subr.mxu0 0.0
    %204 = vmatpush1.msra.mxu0 0.0
    %205 = vmatprep.subr.mxu0 %v68
    %206 = vmatpush1.msra.mxu0 %v67
    %207 = vmatprep.subr.mxu0 0.0
    %208 = vmatpush2.msra.mxu0 0.0
    %209 = vmatprep.subr.mxu0 0.0
    %210 = vmatpush2.msra.mxu0 0.0
    %211 = vmatprep.subr.mxu0 0.0
    %212 = vmatpush2.msra.mxu0 0.0
    %213 = vmatprep.subr.mxu0 0.0
    %214 = vmatpush2.msra.mxu0 0.0
    %215 = vmatprep.subr.mxu0 0.0
    %216 = vmatpush2.msra.mxu0 0.0
    %217 = vmatprep.subr.mxu0 0.0
    %218 = vmatpush2.msra.mxu0 0.0
    %219 = vmatprep.subr.mxu0 0.0
    %220 = vmatpush2.msra.mxu0 0.0
    %221 = vmatprep.subr.mxu0 0.0
    %222 = vmatpush2.msra.mxu0 0.0
    %223 = vmatprep.subr.mxu0 0.0
    %224 = vmatpush2.msra.mxu0 0.0
    %225 = vmatprep.subr.mxu0 0.0
    %226 = vmatpush2.msra.mxu0 0.0
    %227 = vmatprep.subr.mxu0 0.0
    %228 = vmatpush2.msra.mxu0 0.0
    %229 = vmatprep.subr.mxu0 0.0
    %230 = vmatpush2.msra.mxu0 0.0
    %231 = vmatprep.subr.mxu0 0.0
    %232 = vmatpush2.msra.mxu0 0.0
    %233 = vmatprep.subr.mxu0 0.0
    %234 = vmatpush2.msra.mxu0 0.0
    %235 = vmatprep.subr.mxu0 0.0
    %236 = vmatpush2.msra.mxu0 0.0
    %237 = vmatprep.subr.mxu0 0.0
    %238 = vmatpush2.msra.mxu0 0.0
    %239 = vmatprep.mubr.f32.mxu0 0.0
    %240 = vmatmul.mubr.f32.gmra.mxu0 %v93
    %v241 = vpop.f32.mrf.mxu0
    %v242 = vadd.f32 %v82, %v241
    %v243 = vpop.f32.mrf.mxu0
    %v244 = vadd.f32 %v86, %v243
    %245 = vmatprep.mubr.f32.mxu0 0.0
    %246 = vmatmul.mubr.f32.gmra.mxu0 %v96
    %v247 = vpop.f32.mrf.mxu0
    %v248 = vadd.f32 %v82, %v247
    %v249 = vpop.f32.mrf.mxu0
    %v250 = vadd.f32 %v86, %v249
    %251 = vdwg.mxu0
    %v252 = vld [vmem:[#allocation5] sm:$0xff]
    %v253 = vld [vmem:[#allocation5 + $0x8] sm:$0xff]
    %v254 = vld [vmem:[#allocation5 + $0x10] sm:$0xff]
    %v255 = vld [vmem:[#allocation5 + $0x18] sm:$0xff]
    %v256 = vld [vmem:[#allocation5 + $0x20] sm:$0xff]
    %v257 = vld [vmem:[#allocation5 + $0x28] sm:$0xff]
    %v258 = vld [vmem:[#allocation5 + $0x30] sm:$0xff]
    %v259 = vld [vmem:[#allocation5 + $0x38] sm:$0xff]
    %v260 = vld [vmem:[#allocation5 + $0x40] sm:$0xff]
    %v261 = vld [vmem:[#allocation5 + $0x48] sm:$0xff]
    %v262 = vld [vmem:[#allocation5 + $0x50] sm:$0xff]
    %v263 = vld [vmem:[#allocation5 + $0x58] sm:$0xff]
    %v264 = vld [vmem:[#allocation5 + $0x60] sm:$0xff]
    %v265 = vld [vmem:[#allocation5 + $0x68] sm:$0xff]
    %v266 = vld [vmem:[#allocation5 + $0x70] sm:$0xff]
    %v267 = vld [vmem:[#allocation5 + $0x78] sm:$0xff]
    %v268 = vld [vmem:[#allocation5 + $0x80] sm:$0xff]
    %v269 = vld [vmem:[#allocation5 + $0x88] sm:$0xff]
    %v270 = vld [vmem:[#allocation5 + $0x90] sm:$0xff]
    %v271 = vld [vmem:[#allocation5 + $0x98] sm:$0xff]
    %v272 = vld [vmem:[#allocation5 + $0xa0] sm:$0xff]
    %v273 = vld [vmem:[#allocation5 + $0xa8] sm:$0xff]
    %v274 = vld [vmem:[#allocation5 + $0xb0] sm:$0xff]
    %v275 = vld [vmem:[#allocation5 + $0xb8] sm:$0xff]
    %v276 = vld [vmem:[#allocation5 + $0xc0] sm:$0xff]
    %v277 = vld [vmem:[#allocation5 + $0xc8] sm:$0xff]
    %v278 = vld [vmem:[#allocation5 + $0xd0] sm:$0xff]
    %v279 = vld [vmem:[#allocation5 + $0xd8] sm:$0xff]
    %v280 = vld [vmem:[#allocation5 + $0xe0] sm:$0xff]
    %v281 = vld [vmem:[#allocation5 + $0xe8] sm:$0xff]
    %v282 = vld [vmem:[#allocation5 + $0xf0] sm:$0xff]
    %v283 = vld [vmem:[#allocation5 + $0xf8] sm:$0xff]
    %v284 = vld [vmem:[#allocation5 + $0x100] sm:$0xff]
    %v285 = vld [vmem:[#allocation5 + $0x108] sm:$0xff]
    %v286 = vld [vmem:[#allocation5 + $0x110] sm:$0xff]
    %v287 = vld [vmem:[#allocation5 + $0x118] sm:$0xff]
    %v288 = vld [vmem:[#allocation5 + $0x120] sm:$0xff]
    %v289 = vld [vmem:[#allocation5 + $0x128] sm:$0xff]
    %v290 = vld [vmem:[#allocation5 + $0x130] sm:$0xff]
    %v291 = vld [vmem:[#allocation5 + $0x138] sm:$0xff]
    %v292 = vld [vmem:[#allocation5 + $0x140] sm:$0xff]
    %v293 = vld [vmem:[#allocation5 + $0x148] sm:$0xff]
    %v294 = vld [vmem:[#allocation5 + $0x150] sm:$0xff]
    %v295 = vld [vmem:[#allocation5 + $0x158] sm:$0xff]
    %v296 = vld [vmem:[#allocation5 + $0x160] sm:$0xff]
    %v297 = vld [vmem:[#allocation5 + $0x168] sm:$0xff]
    %v298 = vld [vmem:[#allocation5 + $0x170] sm:$0xff]
    %v299 = vld [vmem:[#allocation5 + $0x178] sm:$0xff]
    %v300 = vld [vmem:[#allocation5 + $0x180] sm:$0xff]
    %v301 = vld [vmem:[#allocation5 + $0x188] sm:$0xff]
    %v302 = vld [vmem:[#allocation5 + $0x190] sm:$0xff]
    %v303 = vld [vmem:[#allocation5 + $0x198] sm:$0xff]
    %v304 = vld [vmem:[#allocation5 + $0x1a0] sm:$0xff]
    %v305 = vld [vmem:[#allocation5 + $0x1a8] sm:$0xff]
    %v306 = vld [vmem:[#allocation5 + $0x1b0] sm:$0xff]
    %v307 = vld [vmem:[#allocation5 + $0x1b8] sm:$0xff]
    %v308 = vld [vmem:[#allocation5 + $0x1c0] sm:$0xff]
    %v309 = vld [vmem:[#allocation5 + $0x1c8] sm:$0xff]
    %v310 = vld [vmem:[#allocation5 + $0x1d0] sm:$0xff]
    %v311 = vld [vmem:[#allocation5 + $0x1d8] sm:$0xff]
    %v312 = vld [vmem:[#allocation5 + $0x1e0] sm:$0xff]
    %v313 = vld [vmem:[#allocation5 + $0x1e8] sm:$0xff]
    %v314 = vld [vmem:[#allocation5 + $0x1f0] sm:$0xff]
    %v315 = vld [vmem:[#allocation5 + $0x1f8] sm:$0xff]
    %316 = vmatprep.subr.mxu0 %v313
    %317 = vmatpush1.msra.mxu0 %v312
    %318 = vmatprep.subr.mxu0 %v309
    %319 = vmatpush1.msra.mxu0 %v308
    %320 = vmatprep.subr.mxu0 %v305
    %321 = vmatpush1.msra.mxu0 %v304
    %322 = vmatprep.subr.mxu0 %v301
    %323 = vmatpush1.msra.mxu0 %v300
    %324 = vmatprep.subr.mxu0 %v297
    %325 = vmatpush1.msra.mxu0 %v296
    %326 = vmatprep.subr.mxu0 %v293
    %327 = vmatpush1.msra.mxu0 %v292
    %328 = vmatprep.subr.mxu0 %v289
    %329 = vmatpush1.msra.mxu0 %v288
    %330 = vmatprep.subr.mxu0 %v285
    %331 = vmatpush1.msra.mxu0 %v284
    %332 = vmatprep.subr.mxu0 %v281
    %333 = vmatpush1.msra.mxu0 %v280
    %334 = vmatprep.subr.mxu0 %v277
    %335 = vmatpush1.msra.mxu0 %v276
    %336 = vmatprep.subr.mxu0 %v273
    %337 = vmatpush1.msra.mxu0 %v272
    %338 = vmatprep.subr.mxu0 %v269
    %339 = vmatpush1.msra.mxu0 %v268
    %340 = vmatprep.subr.mxu0 %v265
    %341 = vmatpush1.msra.mxu0 %v264
    %342 = vmatprep.subr.mxu0 %v261
    %343 = vmatpush1.msra.mxu0 %v260
    %344 = vmatprep.subr.mxu0 %v257
    %345 = vmatpush1.msra.mxu0 %v256
    %346 = vmatprep.subr.mxu0 %v253
    %347 = vmatpush1.msra.mxu0 %v252
    %348 = vmatprep.subr.mxu0 0.0
    %349 = vmatpush2.msra.mxu0 0.0
    %350 = vmatprep.subr.mxu0 0.0
    %351 = vmatpush2.msra.mxu0 0.0
    %352 = vmatprep.subr.mxu0 0.0
    %353 = vmatpush2.msra.mxu0 0.0
    %354 = vmatprep.subr.mxu0 0.0
    %355 = vmatpush2.msra.mxu0 0.0
    %356 = vmatprep.subr.mxu0 0.0
    %357 = vmatpush2.msra.mxu0 0.0
    %358 = vmatprep.subr.mxu0 0.0
    %359 = vmatpush2.msra.mxu0 0.0
    %360 = vmatprep.subr.mxu0 0.0
    %361 = vmatpush2.msra.mxu0 0.0
    %362 = vmatprep.subr.mxu0 0.0
    %363 = vmatpush2.msra.mxu0 0.0
    %364 = vmatprep.subr.mxu0 0.0
    %365 = vmatpush2.msra.mxu0 0.0
    %366 = vmatprep.subr.mxu0 0.0
    %367 = vmatpush2.msra.mxu0 0.0
    %368 = vmatprep.subr.mxu0 0.0
    %369 = vmatpush2.msra.mxu0 0.0
    %370 = vmatprep.subr.mxu0 0.0
    %371 = vmatpush2.msra.mxu0 0.0
    %372 = vmatprep.subr.mxu0 0.0
    %373 = vmatpush2.msra.mxu0 0.0
    %374 = vmatprep.subr.mxu0 0.0
    %375 = vmatpush2.msra.mxu0 0.0
    %376 = vmatprep.subr.mxu0 0.0
    %377 = vmatpush2.msra.mxu0 0.0
    %378 = vmatprep.subr.mxu0 0.0
    %379 = vmatpush2.msra.mxu0 0.0
    %380 = vmatprep.mubr.f32.mxu0 0.0
    %381 = vmatmul.mubr.f32.gmra.mxu0 0.0
    %v382 = vpop.f32.mrf.mxu0
    %v383 = vadd.f32 0.0, %v382
    %v384 = vpop.f32.mrf.mxu0
    %v385 = vadd.f32 0.0, %v384
    %386 = vdwg.mxu0
    %387 = vmatprep.subr.mxu0 %v315
    %388 = vmatpush1.msra.mxu0 %v314
    %389 = vmatprep.subr.mxu0 %v311
    %390 = vmatpush1.msra.mxu0 %v310
    %391 = vmatprep.subr.mxu0 %v307
    %392 = vmatpush1.msra.mxu0 %v306
    %393 = vmatprep.subr.mxu0 %v303
    %394 = vmatpush1.msra.mxu0 %v302
    %395 = vmatprep.subr.mxu0 %v299
    %396 = vmatpush1.msra.mxu0 %v298
    %397 = vmatprep.subr.mxu0 %v295
    %398 = vmatpush1.msra.mxu0 %v294
    %399 = vmatprep.subr.mxu0 %v291
    %400 = vmatpush1.msra.mxu0 %v290
    %401 = vmatprep.subr.mxu0 %v287
    %402 = vmatpush1.msra.mxu0 %v286
    %403 = vmatprep.subr.mxu0 %v283
    %404 = vmatpush1.msra.mxu0 %v282
    %405 = vmatprep.subr.mxu0 %v279
    %406 = vmatpush1.msra.mxu0 %v278
    %407 = vmatprep.subr.mxu0 %v275
    %408 = vmatpush1.msra.mxu0 %v274
    %409 = vmatprep.subr.mxu0 %v271
    %410 = vmatpush1.msra.mxu0 %v270
    %411 = vmatprep.subr.mxu0 %v267
    %412 = vmatpush1.msra.mxu0 %v266
    %413 = vmatprep.subr.mxu0 %v263
    %414 = vmatpush1.msra.mxu0 %v262
    %415 = vmatprep.subr.mxu0 %v259
    %416 = vmatpush1.msra.mxu0 %v258
    %417 = vmatprep.subr.mxu0 %v255
    %418 = vmatpush1.msra.mxu0 %v254
    %419 = vmatprep.subr.mxu0 0.0
    %420 = vmatpush2.msra.mxu0 0.0
    %421 = vmatprep.subr.mxu0 0.0
    %422 = vmatpush2.msra.mxu0 0.0
    %423 = vmatprep.subr.mxu0 0.0
    %424 = vmatpush2.msra.mxu0 0.0
    %425 = vmatprep.subr.mxu0 0.0
    %426 = vmatpush2.msra.mxu0 0.0
    %427 = vmatprep.subr.mxu0 0.0
    %428 = vmatpush2.msra.mxu0 0.0
    %429 = vmatprep.subr.mxu0 0.0
    %430 = vmatpush2.msra.mxu0 0.0
    %431 = vmatprep.subr.mxu0 0.0
    %432 = vmatpush2.msra.mxu0 0.0
    %433 = vmatprep.subr.mxu0 0.0
    %434 = vmatpush2.msra.mxu0 0.0
    %435 = vmatprep.subr.mxu0 0.0
    %436 = vmatpush2.msra.mxu0 0.0
    %437 = vmatprep.subr.mxu0 0.0
    %438 = vmatpush2.msra.mxu0 0.0
    %439 = vmatprep.subr.mxu0 0.0
    %440 = vmatpush2.msra.mxu0 0.0
    %441 = vmatprep.subr.mxu0 0.0
    %442 = vmatpush2.msra.mxu0 0.0
    %443 = vmatprep.subr.mxu0 0.0
    %444 = vmatpush2.msra.mxu0 0.0
    %445 = vmatprep.subr.mxu0 0.0
    %446 = vmatpush2.msra.mxu0 0.0
    %447 = vmatprep.subr.mxu0 0.0
    %448 = vmatpush2.msra.mxu0 0.0
    %449 = vmatprep.subr.mxu0 0.0
    %450 = vmatpush2.msra.mxu0 0.0
    %451 = vmatprep.mubr.f32.mxu0 0.0
    %452 = vmatmul.mubr.f32.gmra.mxu0 0.0
    %v453 = vpop.f32.mrf.mxu0
    %v454 = vadd.f32 0.0, %v453
    %v455 = vpop.f32.mrf.mxu0
    %v456 = vadd.f32 0.0, %v455
    %457 = vdwg.mxu0
    %v458 = vadd.f32 %v165, %v383
    %v459 = vadd.f32 %v167, %v385
    %v460 = vadd.f32 %v242, %v454
    %v461 = vadd.f32 %v244, %v456
    %v462 = vxor.u32 %v458, 2147483648
    %v463 = vmul.f32 %v462, 1.442695
    %v464 = vpow.pop %v463
    %v465 = vadd.f32 %v464, 1.0
    %v466 = vrcp.pop %v465
    %v467 = vmul.f32 1.0, %v466
    %v468 = vxor.u32 %v459, 2147483648
    %v469 = vmul.f32 %v468, 1.442695
    %v470 = vpow.pop %v469
    %v471 = vadd.f32 %v470, 1.0
    %v472 = vrcp.pop %v471
    %v473 = vmul.f32 1.0, %v472
    %v474 = vtanh.pop %v460
    %v475 = vxor.u32 %v461, 2147483648
    %v476 = vmul.f32 %v475, 1.442695
    %v477 = vpow.pop %v476
    %v478 = vadd.f32 %v477, 1.0
    %v479 = vrcp.pop %v478
    %v480 = vmul.f32 1.0, %v479
    %v481 = vmul.f32 %v473, 0.0
    %v482 = vmul.f32 %v467, %v474
    %v483 = vadd.f32 %v481, %v482
    %v484 = vtanh.pop %v483
    %v485 = vmul.f32 %v480, %v484
    %486 = vmatprep.subr.mxu0 %v313
    %487 = vmatpush1.msra.mxu0 %v312
    %488 = vmatprep.subr.mxu0 %v309
    %489 = vmatpush1.msra.mxu0 %v308
    %490 = vmatprep.subr.mxu0 %v305
    %491 = vmatpush1.msra.mxu0 %v304
    %492 = vmatprep.subr.mxu0 %v301
    %493 = vmatpush1.msra.mxu0 %v300
    %494 = vmatprep.subr.mxu0 %v297
    %495 = vmatpush1.msra.mxu0 %v296
    %496 = vmatprep.subr.mxu0 %v293
    %497 = vmatpush1.msra.mxu0 %v292
    %498 = vmatprep.subr.mxu0 %v289
    %499 = vmatpush1.msra.mxu0 %v288
    %500 = vmatprep.subr.mxu0 %v285
    %501 = vmatpush1.msra.mxu0 %v284
    %502 = vmatprep.subr.mxu0 %v281
    %503 = vmatpush1.msra.mxu0 %v280
    %504 = vmatprep.subr.mxu0 %v277
    %505 = vmatpush1.msra.mxu0 %v276
    %506 = vmatprep.subr.mxu0 %v273
    %507 = vmatpush1.msra.mxu0 %v272
    %508 = vmatprep.subr.mxu0 %v269
    %509 = vmatpush1.msra.mxu0 %v268
    %510 = vmatprep.subr.mxu0 %v265
    %511 = vmatpush1.msra.mxu0 %v264
    %512 = vmatprep.subr.mxu0 %v261
    %513 = vmatpush1.msra.mxu0 %v260
    %514 = vmatprep.subr.mxu0 %v257
    %515 = vmatpush1.msra.mxu0 %v256
    %516 = vmatprep.subr.mxu0 %v253
    %517 = vmatpush1.msra.mxu0 %v252
    %518 = vmatprep.subr.mxu0 0.0
    %519 = vmatpush2.msra.mxu0 0.0
    %520 = vmatprep.subr.mxu0 0.0
    %521 = vmatpush2.msra.mxu0 0.0
    %522 = vmatprep.subr.mxu0 0.0
    %523 = vmatpush2.msra.mxu0 0.0
    %524 = vmatprep.subr.mxu0 0.0
    %525 = vmatpush2.msra.mxu0 0.0
    %526 = vmatprep.subr.mxu0 0.0
    %527 = vmatpush2.msra.mxu0 0.0
    %528 = vmatprep.subr.mxu0 0.0
    %529 = vmatpush2.msra.mxu0 0.0
    %530 = vmatprep.subr.mxu0 0.0
    %531 = vmatpush2.msra.mxu0 0.0
    %532 = vmatprep.subr.mxu0 0.0
    %533 = vmatpush2.msra.mxu0 0.0
    %534 = vmatprep.subr.mxu0 0.0
    %535 = vmatpush2.msra.mxu0 0.0
    %536 = vmatprep.subr.mxu0 0.0
    %537 = vmatpush2.msra.mxu0 0.0
    %538 = vmatprep.subr.mxu0 0.0
    %539 = vmatpush2.msra.mxu0 0.0
    %540 = vmatprep.subr.mxu0 0.0
    %541 = vmatpush2.msra.mxu0 0.0
    %542 = vmatprep.subr.mxu0 0.0
    %543 = vmatpush2.msra.mxu0 0.0
    %544 = vmatprep.subr.mxu0 0.0
    %545 = vmatpush2.msra.mxu0 0.0
    %546 = vmatprep.subr.mxu0 0.0
    %547 = vmatpush2.msra.mxu0 0.0
    %548 = vmatprep.subr.mxu0 0.0
    %549 = vmatpush2.msra.mxu0 0.0
    %550 = vmatprep.mubr.f32.mxu0 0.0
    %551 = vmatmul.mubr.f32.gmra.mxu0 %v485
    %v552 = vpop.f32.mrf.mxu0
    %v553 = vadd.f32 0.0, %v552
    %v554 = vpop.f32.mrf.mxu0
    %v555 = vadd.f32 0.0, %v554
    %556 = vdwg.mxu0
    %557 = vmatprep.subr.mxu0 %v315
    %558 = vmatpush1.msra.mxu0 %v314
    %559 = vmatprep.subr.mxu0 %v311
    %560 = vmatpush1.msra.mxu0 %v310
    %561 = vmatprep.subr.mxu0 %v307
    %562 = vmatpush1.msra.mxu0 %v306
    %563 = vmatprep.subr.mxu0 %v303
    %564 = vmatpush1.msra.mxu0 %v302
    %565 = vmatprep.subr.mxu0 %v299
    %566 = vmatpush1.msra.mxu0 %v298
    %567 = vmatprep.subr.mxu0 %v295
    %568 = vmatpush1.msra.mxu0 %v294
    %569 = vmatprep.subr.mxu0 %v291
    %570 = vmatpush1.msra.mxu0 %v290
    %571 = vmatprep.subr.mxu0 %v287
    %572 = vmatpush1.msra.mxu0 %v286
    %573 = vmatprep.subr.mxu0 %v283
    %574 = vmatpush1.msra.mxu0 %v282
    %575 = vmatprep.subr.mxu0 %v279
    %576 = vmatpush1.msra.mxu0 %v278
    %577 = vmatprep.subr.mxu0 %v275
    %578 = vmatpush1.msra.mxu0 %v274
    %579 = vmatprep.subr.mxu0 %v271
    %580 = vmatpush1.msra.mxu0 %v270
    %581 = vmatprep.subr.mxu0 %v267
    %582 = vmatpush1.msra.mxu0 %v266
    %583 = vmatprep.subr.mxu0 %v263
    %584 = vmatpush1.msra.mxu0 %v262
    %585 = vmatprep.subr.mxu0 %v259
    %586 = vmatpush1.msra.mxu0 %v258
    %587 = vmatprep.subr.mxu0 %v255
    %588 = vmatpush1.msra.mxu0 %v254
    %589 = vmatprep.subr.mxu0 0.0
    %590 = vmatpush2.msra.mxu0 0.0
    %591 = vmatprep.subr.mxu0 0.0
    %592 = vmatpush2.msra.mxu0 0.0
    %593 = vmatprep.subr.mxu0 0.0
    %594 = vmatpush2.msra.mxu0 0.0
    %595 = vmatprep.subr.mxu0 0.0
    %596 = vmatpush2.msra.mxu0 0.0
    %597 = vmatprep.subr.mxu0 0.0
    %598 = vmatpush2.msra.mxu0 0.0
    %599 = vmatprep.subr.mxu0 0.0
    %600 = vmatpush2.msra.mxu0 0.0
    %601 = vmatprep.subr.mxu0 0.0
    %602 = vmatpush2.msra.mxu0 0.0
    %603 = vmatprep.subr.mxu0 0.0
    %604 = vmatpush2.msra.mxu0 0.0
    %605 = vmatprep.subr.mxu0 0.0
    %606 = vmatpush2.msra.mxu0 0.0
    %607 = vmatprep.subr.mxu0 0.0
    %608 = vmatpush2.msra.mxu0 0.0
    %609 = vmatprep.subr.mxu0 0.0
    %610 = vmatpush2.msra.mxu0 0.0
    %611 = vmatprep.subr.mxu0 0.0
    %612 = vmatpush2.msra.mxu0 0.0
    %613 = vmatprep.subr.mxu0 0.0
    %614 = vmatpush2.msra.mxu0 0.0
    %615 = vmatprep.subr.mxu0 0.0
    %616 = vmatpush2.msra.mxu0 0.0
    %617 = vmatprep.subr.mxu0 0.0
    %618 = vmatpush2.msra.mxu0 0.0
    %619 = vmatprep.subr.mxu0 0.0
    %620 = vmatpush2.msra.mxu0 0.0
    %621 = vmatprep.mubr.f32.mxu0 0.0
    %622 = vmatmul.mubr.f32.gmra.mxu0 %v485
    %v623 = vpop.f32.mrf.mxu0
    %v624 = vadd.f32 0.0, %v623
    %v625 = vpop.f32.mrf.mxu0
    %v626 = vadd.f32 0.0, %v625
    %627 = vdwg.mxu0
    %v632 = vrot.slane %v553, 6
    %v633 = vrot.slane %v555, 6
    %v634 = vrot.slane %v624, 6
    %v635 = vrot.slane %v626, 6
    %v640 = vadd.f32 %v165, %v632
    %v641 = vadd.f32 %v167, %v633
    %v642 = vadd.f32 %v242, %v634
    %v643 = vadd.f32 %v244, %v635
    %v644 = vxor.u32 %v640, 2147483648
    %v645 = vmul.f32 %v644, 1.442695
    %v646 = vpow.pop %v645
    %v647 = vadd.f32 %v646, 1.0
    %v648 = vrcp.pop %v647
    %v649 = vmul.f32 1.0, %v648
    %v650 = vxor.u32 %v641, 2147483648
    %v651 = vmul.f32 %v650, 1.442695
    %v652 = vpow.pop %v651
    %v653 = vadd.f32 %v652, 1.0
    %v654 = vrcp.pop %v653
    %v655 = vmul.f32 1.0, %v654
    %v656 = vtanh.pop %v642
    %v657 = vxor.u32 %v643, 2147483648
    %v658 = vmul.f32 %v657, 1.442695
    %v659 = vpow.pop %v658
    %v660 = vadd.f32 %v659, 1.0
    %v661 = vrcp.pop %v660
    %v662 = vmul.f32 1.0, %v661
    %v664 = vrot.slane %v483, 6
    %v666 = vmul.f32 %v655, %v664
    %v667 = vmul.f32 %v649, %v656
    %v668 = vadd.f32 %v666, %v667
    %v669 = vtanh.pop %v668
    %v670 = vmul.f32 %v662, %v669
    %v672 = vrot.slane %v670, 2
    %674 = vmatprep.subr.mxu0 %v313
    %675 = vmatpush1.msra.mxu0 %v312
    %676 = vmatprep.subr.mxu0 %v309
    %677 = vmatpush1.msra.mxu0 %v308
    %678 = vmatprep.subr.mxu0 %v305
    %679 = vmatpush1.msra.mxu0 %v304
    %680 = vmatprep.subr.mxu0 %v301
    %681 = vmatpush1.msra.mxu0 %v300
    %682 = vmatprep.subr.mxu0 %v297
    %683 = vmatpush1.msra.mxu0 %v296
    %684 = vmatprep.subr.mxu0 %v293
    %685 = vmatpush1.msra.mxu0 %v292
    %686 = vmatprep.subr.mxu0 %v289
    %687 = vmatpush1.msra.mxu0 %v288
    %688 = vmatprep.subr.mxu0 %v285
    %689 = vmatpush1.msra.mxu0 %v284
    %690 = vmatprep.subr.mxu0 %v281
    %691 = vmatpush1.msra.mxu0 %v280
    %692 = vmatprep.subr.mxu0 %v277
    %693 = vmatpush1.msra.mxu0 %v276
    %694 = vmatprep.subr.mxu0 %v273
    %695 = vmatpush1.msra.mxu0 %v272
    %696 = vmatprep.subr.mxu0 %v269
    %697 = vmatpush1.msra.mxu0 %v268
    %698 = vmatprep.subr.mxu0 %v265
    %699 = vmatpush1.msra.mxu0 %v264
    %700 = vmatprep.subr.mxu0 %v261
    %701 = vmatpush1.msra.mxu0 %v260
    %702 = vmatprep.subr.mxu0 %v257
    %703 = vmatpush1.msra.mxu0 %v256
    %704 = vmatprep.subr.mxu0 %v253
    %705 = vmatpush1.msra.mxu0 %v252
    %706 = vmatprep.subr.mxu0 0.0
    %707 = vmatpush2.msra.mxu0 0.0
    %708 = vmatprep.subr.mxu0 0.0
    %709 = vmatpush2.msra.mxu0 0.0
    %710 = vmatprep.subr.mxu0 0.0
    %711 = vmatpush2.msra.mxu0 0.0
    %712 = vmatprep.subr.mxu0 0.0
    %713 = vmatpush2.msra.mxu0 0.0
    %714 = vmatprep.subr.mxu0 0.0
    %715 = vmatpush2.msra.mxu0 0.0
    %716 = vmatprep.subr.mxu0 0.0
    %717 = vmatpush2.msra.mxu0 0.0
    %718 = vmatprep.subr.mxu0 0.0
    %719 = vmatpush2.msra.mxu0 0.0
    %720 = vmatprep.subr.mxu0 0.0
    %721 = vmatpush2.msra.mxu0 0.0
    %722 = vmatprep.subr.mxu0 0.0
    %723 = vmatpush2.msra.mxu0 0.0
    %724 = vmatprep.subr.mxu0 0.0
    %725 = vmatpush2.msra.mxu0 0.0
    %726 = vmatprep.subr.mxu0 0.0
    %727 = vmatpush2.msra.mxu0 0.0
    %728 = vmatprep.subr.mxu0 0.0
    %729 = vmatpush2.msra.mxu0 0.0
    %730 = vmatprep.subr.mxu0 0.0
    %731 = vmatpush2.msra.mxu0 0.0
    %732 = vmatprep.subr.mxu0 0.0
    %733 = vmatpush2.msra.mxu0 0.0
    %734 = vmatprep.subr.mxu0 0.0
    %735 = vmatpush2.msra.mxu0 0.0
    %736 = vmatprep.subr.mxu0 0.0
    %737 = vmatpush2.msra.mxu0 0.0
    %738 = vmatprep.mubr.f32.mxu0 0.0
    %739 = vmatmul.mubr.f32.gmra.mxu0 %v672
    %v740 = vpop.f32.mrf.mxu0
    %v741 = vadd.f32 0.0, %v740
    %v742 = vpop.f32.mrf.mxu0
    %v743 = vadd.f32 0.0, %v742
    %744 = vdwg.mxu0
    %745 = vmatprep.subr.mxu0 %v315
    %746 = vmatpush1.msra.mxu0 %v314
    %747 = vmatprep.subr.mxu0 %v311
    %748 = vmatpush1.msra.mxu0 %v310
    %749 = vmatprep.subr.mxu0 %v307
    %750 = vmatpush1.msra.mxu0 %v306
    %751 = vmatprep.subr.mxu0 %v303
    %752 = vmatpush1.msra.mxu0 %v302
    %753 = vmatprep.subr.mxu0 %v299
    %754 = vmatpush1.msra.mxu0 %v298
    %755 = vmatprep.subr.mxu0 %v295
    %756 = vmatpush1.msra.mxu0 %v294
    %757 = vmatprep.subr.mxu0 %v291
    %758 = vmatpush1.msra.mxu0 %v290
    %759 = vmatprep.subr.mxu0 %v287
    %760 = vmatpush1.msra.mxu0 %v286
    %761 = vmatprep.subr.mxu0 %v283
    %762 = vmatpush1.msra.mxu0 %v282
    %763 = vmatprep.subr.mxu0 %v279
    %764 = vmatpush1.msra.mxu0 %v278
    %765 = vmatprep.subr.mxu0 %v275
    %766 = vmatpush1.msra.mxu0 %v274
    %767 = vmatprep.subr.mxu0 %v271
    %768 = vmatpush1.msra.mxu0 %v270
    %769 = vmatprep.subr.mxu0 %v267
    %770 = vmatpush1.msra.mxu0 %v266
    %771 = vmatprep.subr.mxu0 %v263
    %772 = vmatpush1.msra.mxu0 %v262
    %773 = vmatprep.subr.mxu0 %v259
    %774 = vmatpush1.msra.mxu0 %v258
    %775 = vmatprep.subr.mxu0 %v255
    %776 = vmatpush1.msra.mxu0 %v254
    %777 = vmatprep.subr.mxu0 0.0
    %778 = vmatpush2.msra.mxu0 0.0
    %779 = vmatprep.subr.mxu0 0.0
    %780 = vmatpush2.msra.mxu0 0.0
    %781 = vmatprep.subr.mxu0 0.0
    %782 = vmatpush2.msra.mxu0 0.0
    %783 = vmatprep.subr.mxu0 0.0
    %784 = vmatpush2.msra.mxu0 0.0
    %785 = vmatprep.subr.mxu0 0.0
    %786 = vmatpush2.msra.mxu0 0.0
    %787 = vmatprep.subr.mxu0 0.0
    %788 = vmatpush2.msra.mxu0 0.0
    %789 = vmatprep.subr.mxu0 0.0
    %790 = vmatpush2.msra.mxu0 0.0
    %791 = vmatprep.subr.mxu0 0.0
    %792 = vmatpush2.msra.mxu0 0.0
    %793 = vmatprep.subr.mxu0 0.0
    %794 = vmatpush2.msra.mxu0 0.0
    %795 = vmatprep.subr.mxu0 0.0
    %796 = vmatpush2.msra.mxu0 0.0
    %797 = vmatprep.subr.mxu0 0.0
    %798 = vmatpush2.msra.mxu0 0.0
    %799 = vmatprep.subr.mxu0 0.0
    %800 = vmatpush2.msra.mxu0 0.0
    %801 = vmatprep.subr.mxu0 0.0
    %802 = vmatpush2.msra.mxu0 0.0
    %803 = vmatprep.subr.mxu0 0.0
    %804 = vmatpush2.msra.mxu0 0.0
    %805 = vmatprep.subr.mxu0 0.0
    %806 = vmatpush2.msra.mxu0 0.0
    %807 = vmatprep.subr.mxu0 0.0
    %808 = vmatpush2.msra.mxu0 0.0
    %809 = vmatprep.mubr.f32.mxu0 0.0
    %810 = vmatmul.mubr.f32.gmra.mxu0 %v672
    %v811 = vpop.f32.mrf.mxu0
    %v812 = vadd.f32 0.0, %v811
    %v813 = vpop.f32.mrf.mxu0
    %v814 = vadd.f32 0.0, %v813
    %815 = vdwg.mxu0
    %v820 = vrot.slane %v741, 4
    %v821 = vrot.slane %v743, 4
    %v822 = vrot.slane %v812, 4
    %v823 = vrot.slane %v814, 4
    %v828 = vadd.f32 %v165, %v820
    %v829 = vadd.f32 %v167, %v821
    %v830 = vadd.f32 %v242, %v822
    %v831 = vadd.f32 %v244, %v823
    %v832 = vxor.u32 %v828, 2147483648
    %v833 = vmul.f32 %v832, 1.442695
    %v834 = vpow.pop %v833
    %v835 = vadd.f32 %v834, 1.0
    %v836 = vrcp.pop %v835
    %v837 = vmul.f32 1.0, %v836
    %v838 = vxor.u32 %v829, 2147483648
    %v839 = vmul.f32 %v838, 1.442695
    %v840 = vpow.pop %v839
    %v841 = vadd.f32 %v840, 1.0
    %v842 = vrcp.pop %v841
    %v843 = vmul.f32 1.0, %v842
    %v844 = vtanh.pop %v830
    %v845 = vxor.u32 %v831, 2147483648
    %v846 = vmul.f32 %v845, 1.442695
    %v847 = vpow.pop %v846
    %v848 = vadd.f32 %v847, 1.0
    %v849 = vrcp.pop %v848
    %v850 = vmul.f32 1.0, %v849
    %v852 = vrot.slane %v668, 6
    %v854 = vmul.f32 %v843, %v852
    %v855 = vmul.f32 %v837, %v844
    %v856 = vadd.f32 %v854, %v855
    %v857 = vtanh.pop %v856
    %v858 = vmul.f32 %v850, %v857
    %v860 = vrot.slane %v858, 4
    %862 = vmatprep.subr.mxu0 %v313
    %863 = vmatpush1.msra.mxu0 %v312
    %864 = vmatprep.subr.mxu0 %v309
    %865 = vmatpush1.msra.mxu0 %v308
    %866 = vmatprep.subr.mxu0 %v305
    %867 = vmatpush1.msra.mxu0 %v304
    %868 = vmatprep.subr.mxu0 %v301
    %869 = vmatpush1.msra.mxu0 %v300
    %870 = vmatprep.subr.mxu0 %v297
    %871 = vmatpush1.msra.mxu0 %v296
    %872 = vmatprep.subr.mxu0 %v293
    %873 = vmatpush1.msra.mxu0 %v292
    %874 = vmatprep.subr.mxu0 %v289
    %875 = vmatpush1.msra.mxu0 %v288
    %876 = vmatprep.subr.mxu0 %v285
    %877 = vmatpush1.msra.mxu0 %v284
    %878 = vmatprep.subr.mxu0 %v281
    %879 = vmatpush1.msra.mxu0 %v280
    %880 = vmatprep.subr.mxu0 %v277
    %881 = vmatpush1.msra.mxu0 %v276
    %882 = vmatprep.subr.mxu0 %v273
    %883 = vmatpush1.msra.mxu0 %v272
    %884 = vmatprep.subr.mxu0 %v269
    %885 = vmatpush1.msra.mxu0 %v268
    %886 = vmatprep.subr.mxu0 %v265
    %887 = vmatpush1.msra.mxu0 %v264
    %888 = vmatprep.subr.mxu0 %v261
    %889 = vmatpush1.msra.mxu0 %v260
    %890 = vmatprep.subr.mxu0 %v257
    %891 = vmatpush1.msra.mxu0 %v256
    %892 = vmatprep.subr.mxu0 %v253
    %893 = vmatpush1.msra.mxu0 %v252
    %894 = vmatprep.subr.mxu0 0.0
    %895 = vmatpush2.msra.mxu0 0.0
    %896 = vmatprep.subr.mxu0 0.0
    %897 = vmatpush2.msra.mxu0 0.0
    %898 = vmatprep.subr.mxu0 0.0
    %899 = vmatpush2.msra.mxu0 0.0
    %900 = vmatprep.subr.mxu0 0.0
    %901 = vmatpush2.msra.mxu0 0.0
    %902 = vmatprep.subr.mxu0 0.0
    %903 = vmatpush2.msra.mxu0 0.0
    %904 = vmatprep.subr.mxu0 0.0
    %905 = vmatpush2.msra.mxu0 0.0
    %906 = vmatprep.subr.mxu0 0.0
    %907 = vmatpush2.msra.mxu0 0.0
    %908 = vmatprep.subr.mxu0 0.0
    %909 = vmatpush2.msra.mxu0 0.0
    %910 = vmatprep.subr.mxu0 0.0
    %911 = vmatpush2.msra.mxu0 0.0
    %912 = vmatprep.subr.mxu0 0.0
    %913 = vmatpush2.msra.mxu0 0.0
    %914 = vmatprep.subr.mxu0 0.0
    %915 = vmatpush2.msra.mxu0 0.0
    %916 = vmatprep.subr.mxu0 0.0
    %917 = vmatpush2.msra.mxu0 0.0
    %918 = vmatprep.subr.mxu0 0.0
    %919 = vmatpush2.msra.mxu0 0.0
    %920 = vmatprep.subr.mxu0 0.0
    %921 = vmatpush2.msra.mxu0 0.0
    %922 = vmatprep.subr.mxu0 0.0
    %923 = vmatpush2.msra.mxu0 0.0
    %924 = vmatprep.subr.mxu0 0.0
    %925 = vmatpush2.msra.mxu0 0.0
    %926 = vmatprep.mubr.f32.mxu0 0.0
    %927 = vmatmul.mubr.f32.gmra.mxu0 %v860
    %v928 = vpop.f32.mrf.mxu0
    %v929 = vadd.f32 0.0, %v928
    %v930 = vpop.f32.mrf.mxu0
    %v931 = vadd.f32 0.0, %v930
    %932 = vdwg.mxu0
    %933 = vmatprep.subr.mxu0 %v315
    %934 = vmatpush1.msra.mxu0 %v314
    %935 = vmatprep.subr.mxu0 %v311
    %936 = vmatpush1.msra.mxu0 %v310
    %937 = vmatprep.subr.mxu0 %v307
    %938 = vmatpush1.msra.mxu0 %v306
    %939 = vmatprep.subr.mxu0 %v303
    %940 = vmatpush1.msra.mxu0 %v302
    %941 = vmatprep.subr.mxu0 %v299
    %942 = vmatpush1.msra.mxu0 %v298
    %943 = vmatprep.subr.mxu0 %v295
    %944 = vmatpush1.msra.mxu0 %v294
    %945 = vmatprep.subr.mxu0 %v291
    %946 = vmatpush1.msra.mxu0 %v290
    %947 = vmatprep.subr.mxu0 %v287
    %948 = vmatpush1.msra.mxu0 %v286
    %949 = vmatprep.subr.mxu0 %v283
    %950 = vmatpush1.msra.mxu0 %v282
    %951 = vmatprep.subr.mxu0 %v279
    %952 = vmatpush1.msra.mxu0 %v278
    %953 = vmatprep.subr.mxu0 %v275
    %954 = vmatpush1.msra.mxu0 %v274
    %955 = vmatprep.subr.mxu0 %v271
    %956 = vmatpush1.msra.mxu0 %v270
    %957 = vmatprep.subr.mxu0 %v267
    %958 = vmatpush1.msra.mxu0 %v266
    %959 = vmatprep.subr.mxu0 %v263
    %960 = vmatpush1.msra.mxu0 %v262
    %961 = vmatprep.subr.mxu0 %v259
    %962 = vmatpush1.msra.mxu0 %v258
    %963 = vmatprep.subr.mxu0 %v255
    %964 = vmatpush1.msra.mxu0 %v254
    %965 = vmatprep.subr.mxu0 0.0
    %966 = vmatpush2.msra.mxu0 0.0
    %967 = vmatprep.subr.mxu0 0.0
    %968 = vmatpush2.msra.mxu0 0.0
    %969 = vmatprep.subr.mxu0 0.0
    %970 = vmatpush2.msra.mxu0 0.0
    %971 = vmatprep.subr.mxu0 0.0
    %972 = vmatpush2.msra.mxu0 0.0
    %973 = vmatprep.subr.mxu0 0.0
    %974 = vmatpush2.msra.mxu0 0.0
    %975 = vmatprep.subr.mxu0 0.0
    %976 = vmatpush2.msra.mxu0 0.0
    %977 = vmatprep.subr.mxu0 0.0
    %978 = vmatpush2.msra.mxu0 0.0
    %979 = vmatprep.subr.mxu0 0.0
    %980 = vmatpush2.msra.mxu0 0.0
    %981 = vmatprep.subr.mxu0 0.0
    %982 = vmatpush2.msra.mxu0 0.0
    %983 = vmatprep.subr.mxu0 0.0
    %984 = vmatpush2.msra.mxu0 0.0
    %985 = vmatprep.subr.mxu0 0.0
    %986 = vmatpush2.msra.mxu0 0.0
    %987 = vmatprep.subr.mxu0 0.0
    %988 = vmatpush2.msra.mxu0 0.0
    %989 = vmatprep.subr.mxu0 0.0
    %990 = vmatpush2.msra.mxu0 0.0
    %991 = vmatprep.subr.mxu0 0.0
    %992 = vmatpush2.msra.mxu0 0.0
    %993 = vmatprep.subr.mxu0 0.0
    %994 = vmatpush2.msra.mxu0 0.0
    %995 = vmatprep.subr.mxu0 0.0
    %996 = vmatpush2.msra.mxu0 0.0
    %997 = vmatprep.mubr.f32.mxu0 0.0
    %998 = vmatmul.mubr.f32.gmra.mxu0 %v860
    %v999 = vpop.f32.mrf.mxu0
    %v1000 = vadd.f32 0.0, %v999
    %v1001 = vpop.f32.mrf.mxu0
    %v1002 = vadd.f32 0.0, %v1001
    %1003 = vdwg.mxu0
    %v1008 = vrot.slane %v929, 2
    %v1009 = vrot.slane %v931, 2
    %v1010 = vrot.slane %v1000, 2
    %v1011 = vrot.slane %v1002, 2
    %v1016 = vadd.f32 %v165, %v1008
    %v1017 = vadd.f32 %v167, %v1009
    %v1018 = vadd.f32 %v242, %v1010
    %v1019 = vadd.f32 %v244, %v1011
    %v1020 = vxor.u32 %v1016, 2147483648
    %v1021 = vmul.f32 %v1020, 1.442695
    %v1022 = vpow.pop %v1021
    %v1023 = vadd.f32 %v1022, 1.0
    %v1024 = vrcp.pop %v1023
    %v1025 = vmul.f32 1.0, %v1024
    %v1026 = vxor.u32 %v1017, 2147483648
    %v1027 = vmul.f32 %v1026, 1.442695
    %v1028 = vpow.pop %v1027
    %v1029 = vadd.f32 %v1028, 1.0
    %v1030 = vrcp.pop %v1029
    %v1031 = vmul.f32 1.0, %v1030
    %v1032 = vtanh.pop %v1018
    %v1033 = vxor.u32 %v1019, 2147483648
    %v1034 = vmul.f32 %v1033, 1.442695
    %v1035 = vpow.pop %v1034
    %v1036 = vadd.f32 %v1035, 1.0
    %v1037 = vrcp.pop %v1036
    %v1038 = vmul.f32 1.0, %v1037
    %v1040 = vrot.slane %v856, 6
    %v1042 = vmul.f32 %v1031, %v1040
    %v1043 = vmul.f32 %v1025, %v1032
    %v1044 = vadd.f32 %v1042, %v1043
    %v1045 = vtanh.pop %v1044
    %v1046 = vmul.f32 %v1038, %v1045
    %v1048 = vrot.slane %v1046, 6
    %1050 = vmatprep.subr.mxu0 %v313
    %1051 = vmatpush1.msra.mxu0 %v312
    %1052 = vmatprep.subr.mxu0 %v309
    %1053 = vmatpush1.msra.mxu0 %v308
    %1054 = vmatprep.subr.mxu0 %v305
    %1055 = vmatpush1.msra.mxu0 %v304
    %1056 = vmatprep.subr.mxu0 %v301
    %1057 = vmatpush1.msra.mxu0 %v300
    %1058 = vmatprep.subr.mxu0 %v297
    %1059 = vmatpush1.msra.mxu0 %v296
    %1060 = vmatprep.subr.mxu0 %v293
    %1061 = vmatpush1.msra.mxu0 %v292
    %1062 = vmatprep.subr.mxu0 %v289
    %1063 = vmatpush1.msra.mxu0 %v288
    %1064 = vmatprep.subr.mxu0 %v285
    %1065 = vmatpush1.msra.mxu0 %v284
    %1066 = vmatprep.subr.mxu0 %v281
    %1067 = vmatpush1.msra.mxu0 %v280
    %1068 = vmatprep.subr.mxu0 %v277
    %1069 = vmatpush1.msra.mxu0 %v276
    %1070 = vmatprep.subr.mxu0 %v273
    %1071 = vmatpush1.msra.mxu0 %v272
    %1072 = vmatprep.subr.mxu0 %v269
    %1073 = vmatpush1.msra.mxu0 %v268
    %1074 = vmatprep.subr.mxu0 %v265
    %1075 = vmatpush1.msra.mxu0 %v264
    %1076 = vmatprep.subr.mxu0 %v261
    %1077 = vmatpush1.msra.mxu0 %v260
    %1078 = vmatprep.subr.mxu0 %v257
    %1079 = vmatpush1.msra.mxu0 %v256
    %1080 = vmatprep.subr.mxu0 %v253
    %1081 = vmatpush1.msra.mxu0 %v252
    %1082 = vmatprep.subr.mxu0 0.0
    %1083 = vmatpush2.msra.mxu0 0.0
    %1084 = vmatprep.subr.mxu0 0.0
    %1085 = vmatpush2.msra.mxu0 0.0
    %1086 = vmatprep.subr.mxu0 0.0
    %1087 = vmatpush2.msra.mxu0 0.0
    %1088 = vmatprep.subr.mxu0 0.0
    %1089 = vmatpush2.msra.mxu0 0.0
    %1090 = vmatprep.subr.mxu0 0.0
    %1091 = vmatpush2.msra.mxu0 0.0
    %1092 = vmatprep.subr.mxu0 0.0
    %1093 = vmatpush2.msra.mxu0 0.0
    %1094 = vmatprep.subr.mxu0 0.0
    %1095 = vmatpush2.msra.mxu0 0.0
    %1096 = vmatprep.subr.mxu0 0.0
    %1097 = vmatpush2.msra.mxu0 0.0
    %1098 = vmatprep.subr.mxu0 0.0
    %1099 = vmatpush2.msra.mxu0 0.0
    %1100 = vmatprep.subr.mxu0 0.0
    %1101 = vmatpush2.msra.mxu0 0.0
    %1102 = vmatprep.subr.mxu0 0.0
    %1103 = vmatpush2.msra.mxu0 0.0
    %1104 = vmatprep.subr.mxu0 0.0
    %1105 = vmatpush2.msra.mxu0 0.0
    %1106 = vmatprep.subr.mxu0 0.0
    %1107 = vmatpush2.msra.mxu0 0.0
    %1108 = vmatprep.subr.mxu0 0.0
    %1109 = vmatpush2.msra.mxu0 0.0
    %1110 = vmatprep.subr.mxu0 0.0
    %1111 = vmatpush2.msra.mxu0 0.0
    %1112 = vmatprep.subr.mxu0 0.0
    %1113 = vmatpush2.msra.mxu0 0.0
    %1114 = vmatprep.mubr.f32.mxu0 0.0
    %1115 = vmatmul.mubr.f32.gmra.mxu0 %v1048
    %v1116 = vpop.f32.mrf.mxu0
    %v1117 = vadd.f32 0.0, %v1116
    %v1118 = vpop.f32.mrf.mxu0
    %v1119 = vadd.f32 0.0, %v1118
    %1120 = vdwg.mxu0
    %1121 = vmatprep.subr.mxu0 %v315
    %1122 = vmatpush1.msra.mxu0 %v314
    %1123 = vmatprep.subr.mxu0 %v311
    %1124 = vmatpush1.msra.mxu0 %v310
    %1125 = vmatprep.subr.mxu0 %v307
    %1126 = vmatpush1.msra.mxu0 %v306
    %1127 = vmatprep.subr.mxu0 %v303
    %1128 = vmatpush1.msra.mxu0 %v302
    %1129 = vmatprep.subr.mxu0 %v299
    %1130 = vmatpush1.msra.mxu0 %v298
    %1131 = vmatprep.subr.mxu0 %v295
    %1132 = vmatpush1.msra.mxu0 %v294
    %1133 = vmatprep.subr.mxu0 %v291
    %1134 = vmatpush1.msra.mxu0 %v290
    %1135 = vmatprep.subr.mxu0 %v287
    %1136 = vmatpush1.msra.mxu0 %v286
    %1137 = vmatprep.subr.mxu0 %v283
    %1138 = vmatpush1.msra.mxu0 %v282
    %1139 = vmatprep.subr.mxu0 %v279
    %1140 = vmatpush1.msra.mxu0 %v278
    %1141 = vmatprep.subr.mxu0 %v275
    %1142 = vmatpush1.msra.mxu0 %v274
    %1143 = vmatprep.subr.mxu0 %v271
    %1144 = vmatpush1.msra.mxu0 %v270
    %1145 = vmatprep.subr.mxu0 %v267
    %1146 = vmatpush1.msra.mxu0 %v266
    %1147 = vmatprep.subr.mxu0 %v263
    %1148 = vmatpush1.msra.mxu0 %v262
    %1149 = vmatprep.subr.mxu0 %v259
    %1150 = vmatpush1.msra.mxu0 %v258
    %1151 = vmatprep.subr.mxu0 %v255
    %1152 = vmatpush1.msra.mxu0 %v254
    %1153 = vmatprep.subr.mxu0 0.0
    %1154 = vmatpush2.msra.mxu0 0.0
    %1155 = vmatprep.subr.mxu0 0.0
    %1156 = vmatpush2.msra.mxu0 0.0
    %1157 = vmatprep.subr.mxu0 0.0
    %1158 = vmatpush2.msra.mxu0 0.0
    %1159 = vmatprep.subr.mxu0 0.0
    %1160 = vmatpush2.msra.mxu0 0.0
    %1161 = vmatprep.subr.mxu0 0.0
    %1162 = vmatpush2.msra.mxu0 0.0
    %1163 = vmatprep.subr.mxu0 0.0
    %1164 = vmatpush2.msra.mxu0 0.0
    %1165 = vmatprep.subr.mxu0 0.0
    %1166 = vmatpush2.msra.mxu0 0.0
    %1167 = vmatprep.subr.mxu0 0.0
    %1168 = vmatpush2.msra.mxu0 0.0
    %1169 = vmatprep.subr.mxu0 0.0
    %1170 = vmatpush2.msra.mxu0 0.0
    %1171 = vmatprep.subr.mxu0 0.0
    %1172 = vmatpush2.msra.mxu0 0.0
    %1173 = vmatprep.subr.mxu0 0.0
    %1174 = vmatpush2.msra.mxu0 0.0
    %1175 = vmatprep.subr.mxu0 0.0
    %1176 = vmatpush2.msra.mxu0 0.0
    %1177 = vmatprep.subr.mxu0 0.0
    %1178 = vmatpush2.msra.mxu0 0.0
    %1179 = vmatprep.subr.mxu0 0.0
    %1180 = vmatpush2.msra.mxu0 0.0
    %1181 = vmatprep.subr.mxu0 0.0
    %1182 = vmatpush2.msra.mxu0 0.0
    %1183 = vmatprep.subr.mxu0 0.0
    %1184 = vmatpush2.msra.mxu0 0.0
    %1185 = vmatprep.mubr.f32.mxu0 0.0
    %1186 = vmatmul.mubr.f32.gmra.mxu0 %v1048
    %v1187 = vpop.f32.mrf.mxu0
    %v1188 = vadd.f32 0.0, %v1187
    %v1189 = vpop.f32.mrf.mxu0
    %v1190 = vadd.f32 0.0, %v1189
    %1191 = vdwg.mxu0
    %v1192 = vadd.f32 %v171, %v1117
    %v1193 = vadd.f32 %v173, %v1119
    %v1194 = vadd.f32 %v248, %v1188
    %v1195 = vadd.f32 %v250, %v1190
    %v1196 = vxor.u32 %v1192, 2147483648
    %v1197 = vmul.f32 %v1196, 1.442695
    %v1198 = vpow.pop %v1197
    %v1199 = vadd.f32 %v1198, 1.0
    %v1200 = vrcp.pop %v1199
    %v1201 = vmul.f32 1.0, %v1200
    %v1202 = vxor.u32 %v1193, 2147483648
    %v1203 = vmul.f32 %v1202, 1.442695
    %v1204 = vpow.pop %v1203
    %v1205 = vadd.f32 %v1204, 1.0
    %v1206 = vrcp.pop %v1205
    %v1207 = vmul.f32 1.0, %v1206
    %v1208 = vtanh.pop %v1194
    %v1209 = vxor.u32 %v1195, 2147483648
    %v1210 = vmul.f32 %v1209, 1.442695
    %v1211 = vpow.pop %v1210
    %v1212 = vadd.f32 %v1211, 1.0
    %v1213 = vrcp.pop %v1212
    %v1214 = vmul.f32 1.0, %v1213
    %v1216 = vrot.slane %v1044, 6
    %v1218 = vmul.f32 %v1207, %v1216
    %v1219 = vmul.f32 %v1201, %v1208
    %v1220 = vadd.f32 %v1218, %v1219
    %v1221 = vtanh.pop %v1220
    %v1222 = vmul.f32 %v1214, %v1221
    %1223 = vmatprep.subr.mxu0 %v313
    %1224 = vmatpush1.msra.mxu0 %v312
    %1225 = vmatprep.subr.mxu0 %v309
    %1226 = vmatpush1.msra.mxu0 %v308
    %1227 = vmatprep.subr.mxu0 %v305
    %1228 = vmatpush1.msra.mxu0 %v304
    %1229 = vmatprep.subr.mxu0 %v301
    %1230 = vmatpush1.msra.mxu0 %v300
    %1231 = vmatprep.subr.mxu0 %v297
    %1232 = vmatpush1.msra.mxu0 %v296
    %1233 = vmatprep.subr.mxu0 %v293
    %1234 = vmatpush1.msra.mxu0 %v292
    %1235 = vmatprep.subr.mxu0 %v289
    %1236 = vmatpush1.msra.mxu0 %v288
    %1237 = vmatprep.subr.mxu0 %v285
    %1238 = vmatpush1.msra.mxu0 %v284
    %1239 = vmatprep.subr.mxu0 %v281
    %1240 = vmatpush1.msra.mxu0 %v280
    %1241 = vmatprep.subr.mxu0 %v277
    %1242 = vmatpush1.msra.mxu0 %v276
    %1243 = vmatprep.subr.mxu0 %v273
    %1244 = vmatpush1.msra.mxu0 %v272
    %1245 = vmatprep.subr.mxu0 %v269
    %1246 = vmatpush1.msra.mxu0 %v268
    %1247 = vmatprep.subr.mxu0 %v265
    %1248 = vmatpush1.msra.mxu0 %v264
    %1249 = vmatprep.subr.mxu0 %v261
    %1250 = vmatpush1.msra.mxu0 %v260
    %1251 = vmatprep.subr.mxu0 %v257
    %1252 = vmatpush1.msra.mxu0 %v256
    %1253 = vmatprep.subr.mxu0 %v253
    %1254 = vmatpush1.msra.mxu0 %v252
    %1255 = vmatprep.subr.mxu0 0.0
    %1256 = vmatpush2.msra.mxu0 0.0
    %1257 = vmatprep.subr.mxu0 0.0
    %1258 = vmatpush2.msra.mxu0 0.0
    %1259 = vmatprep.subr.mxu0 0.0
    %1260 = vmatpush2.msra.mxu0 0.0
    %1261 = vmatprep.subr.mxu0 0.0
    %1262 = vmatpush2.msra.mxu0 0.0
    %1263 = vmatprep.subr.mxu0 0.0
    %1264 = vmatpush2.msra.mxu0 0.0
    %1265 = vmatprep.subr.mxu0 0.0
    %1266 = vmatpush2.msra.mxu0 0.0
    %1267 = vmatprep.subr.mxu0 0.0
    %1268 = vmatpush2.msra.mxu0 0.0
    %1269 = vmatprep.subr.mxu0 0.0
    %1270 = vmatpush2.msra.mxu0 0.0
    %1271 = vmatprep.subr.mxu0 0.0
    %1272 = vmatpush2.msra.mxu0 0.0
    %1273 = vmatprep.subr.mxu0 0.0
    %1274 = vmatpush2.msra.mxu0 0.0
    %1275 = vmatprep.subr.mxu0 0.0
    %1276 = vmatpush2.msra.mxu0 0.0
    %1277 = vmatprep.subr.mxu0 0.0
    %1278 = vmatpush2.msra.mxu0 0.0
    %1279 = vmatprep.subr.mxu0 0.0
    %1280 = vmatpush2.msra.mxu0 0.0
    %1281 = vmatprep.subr.mxu0 0.0
    %1282 = vmatpush2.msra.mxu0 0.0
    %1283 = vmatprep.subr.mxu0 0.0
    %1284 = vmatpush2.msra.mxu0 0.0
    %1285 = vmatprep.subr.mxu0 0.0
    %1286 = vmatpush2.msra.mxu0 0.0
    %1287 = vmatprep.mubr.f32.mxu0 0.0
    %1288 = vmatmul.mubr.f32.gmra.mxu0 %v1222
    %v1289 = vpop.f32.mrf.mxu0
    %v1290 = vadd.f32 0.0, %v1289
    %v1291 = vpop.f32.mrf.mxu0
    %v1292 = vadd.f32 0.0, %v1291
    %1293 = vdwg.mxu0
    %1294 = vmatprep.subr.mxu0 %v315
    %1295 = vmatpush1.msra.mxu0 %v314
    %1296 = vmatprep.subr.mxu0 %v311
    %1297 = vmatpush1.msra.mxu0 %v310
    %1298 = vmatprep.subr.mxu0 %v307
    %1299 = vmatpush1.msra.mxu0 %v306
    %1300 = vmatprep.subr.mxu0 %v303
    %1301 = vmatpush1.msra.mxu0 %v302
    %1302 = vmatprep.subr.mxu0 %v299
    %1303 = vmatpush1.msra.mxu0 %v298
    %1304 = vmatprep.subr.mxu0 %v295
    %1305 = vmatpush1.msra.mxu0 %v294
    %1306 = vmatprep.subr.mxu0 %v291
    %1307 = vmatpush1.msra.mxu0 %v290
    %1308 = vmatprep.subr.mxu0 %v287
    %1309 = vmatpush1.msra.mxu0 %v286
    %1310 = vmatprep.subr.mxu0 %v283
    %1311 = vmatpush1.msra.mxu0 %v282
    %1312 = vmatprep.subr.mxu0 %v279
    %1313 = vmatpush1.msra.mxu0 %v278
    %1314 = vmatprep.subr.mxu0 %v275
    %1315 = vmatpush1.msra.mxu0 %v274
    %1316 = vmatprep.subr.mxu0 %v271
    %1317 = vmatpush1.msra.mxu0 %v270
    %1318 = vmatprep.subr.mxu0 %v267
    %1319 = vmatpush1.msra.mxu0 %v266
    %1320 = vmatprep.subr.mxu0 %v263
    %1321 = vmatpush1.msra.mxu0 %v262
    %1322 = vmatprep.subr.mxu0 %v259
    %1323 = vmatpush1.msra.mxu0 %v258
    %1324 = vmatprep.subr.mxu0 %v255
    %1325 = vmatpush1.msra.mxu0 %v254
    %1326 = vmatprep.subr.mxu0 0.0
    %1327 = vmatpush2.msra.mxu0 0.0
    %1328 = vmatprep.subr.mxu0 0.0
    %1329 = vmatpush2.msra.mxu0 0.0
    %1330 = vmatprep.subr.mxu0 0.0
    %1331 = vmatpush2.msra.mxu0 0.0
    %1332 = vmatprep.subr.mxu0 0.0
    %1333 = vmatpush2.msra.mxu0 0.0
    %1334 = vmatprep.subr.mxu0 0.0
    %1335 = vmatpush2.msra.mxu0 0.0
    %1336 = vmatprep.subr.mxu0 0.0
    %1337 = vmatpush2.msra.mxu0 0.0
    %1338 = vmatprep.subr.mxu0 0.0
    %1339 = vmatpush2.msra.mxu0 0.0
    %1340 = vmatprep.subr.mxu0 0.0
    %1341 = vmatpush2.msra.mxu0 0.0
    %1342 = vmatprep.subr.mxu0 0.0
    %1343 = vmatpush2.msra.mxu0 0.0
    %1344 = vmatprep.subr.mxu0 0.0
    %1345 = vmatpush2.msra.mxu0 0.0
    %1346 = vmatprep.subr.mxu0 0.0
    %1347 = vmatpush2.msra.mxu0 0.0
    %1348 = vmatprep.subr.mxu0 0.0
    %1349 = vmatpush2.msra.mxu0 0.0
    %1350 = vmatprep.subr.mxu0 0.0
    %1351 = vmatpush2.msra.mxu0 0.0
    %1352 = vmatprep.subr.mxu0 0.0
    %1353 = vmatpush2.msra.mxu0 0.0
    %1354 = vmatprep.subr.mxu0 0.0
    %1355 = vmatpush2.msra.mxu0 0.0
    %1356 = vmatprep.subr.mxu0 0.0
    %1357 = vmatpush2.msra.mxu0 0.0
    %1358 = vmatprep.mubr.f32.mxu0 0.0
    %1359 = vmatmul.mubr.f32.gmra.mxu0 %v1222
    %v1360 = vpop.f32.mrf.mxu0
    %v1361 = vadd.f32 0.0, %v1360
    %v1362 = vpop.f32.mrf.mxu0
    %v1363 = vadd.f32 0.0, %v1362
    %1364 = vdwg.mxu0
    %v1369 = vrot.slane %v1290, 6
    %v1370 = vrot.slane %v1292, 6
    %v1371 = vrot.slane %v1361, 6
    %v1372 = vrot.slane %v1363, 6
    %v1377 = vadd.f32 %v171, %v1369
    %v1378 = vadd.f32 %v173, %v1370
    %v1379 = vadd.f32 %v248, %v1371
    %v1380 = vadd.f32 %v250, %v1372
    %v1381 = vxor.u32 %v1377, 2147483648
    %v1382 = vmul.f32 %v1381, 1.442695
    %v1383 = vpow.pop %v1382
    %v1384 = vadd.f32 %v1383, 1.0
    %v1385 = vrcp.pop %v1384
    %v1386 = vmul.f32 1.0, %v1385
    %v1387 = vxor.u32 %v1378, 2147483648
    %v1388 = vmul.f32 %v1387, 1.442695
    %v1389 = vpow.pop %v1388
    %v1390 = vadd.f32 %v1389, 1.0
    %v1391 = vrcp.pop %v1390
    %v1392 = vmul.f32 1.0, %v1391
    %v1393 = vtanh.pop %v1379
    %v1394 = vxor.u32 %v1380, 2147483648
    %v1395 = vmul.f32 %v1394, 1.442695
    %v1396 = vpow.pop %v1395
    %v1397 = vadd.f32 %v1396, 1.0
    %v1398 = vrcp.pop %v1397
    %v1399 = vmul.f32 1.0, %v1398
    %v1401 = vrot.slane %v1220, 6
    %v1403 = vmul.f32 %v1392, %v1401
    %v1404 = vmul.f32 %v1386, %v1393
    %v1405 = vadd.f32 %v1403, %v1404
    %v1406 = vtanh.pop %v1405
    %v1407 = vmul.f32 %v1399, %v1406
    %v1409 = vrot.slane %v1407, 2
    %1411 = vmatprep.subr.mxu0 %v313
    %1412 = vmatpush1.msra.mxu0 %v312
    %1413 = vmatprep.subr.mxu0 %v309
    %1414 = vmatpush1.msra.mxu0 %v308
    %1415 = vmatprep.subr.mxu0 %v305
    %1416 = vmatpush1.msra.mxu0 %v304
    %1417 = vmatprep.subr.mxu0 %v301
    %1418 = vmatpush1.msra.mxu0 %v300
    %1419 = vmatprep.subr.mxu0 %v297
    %1420 = vmatpush1.msra.mxu0 %v296
    %1421 = vmatprep.subr.mxu0 %v293
    %1422 = vmatpush1.msra.mxu0 %v292
    %1423 = vmatprep.subr.mxu0 %v289
    %1424 = vmatpush1.msra.mxu0 %v288
    %1425 = vmatprep.subr.mxu0 %v285
    %1426 = vmatpush1.msra.mxu0 %v284
    %1427 = vmatprep.subr.mxu0 %v281
    %1428 = vmatpush1.msra.mxu0 %v280
    %1429 = vmatprep.subr.mxu0 %v277
    %1430 = vmatpush1.msra.mxu0 %v276
    %1431 = vmatprep.subr.mxu0 %v273
    %1432 = vmatpush1.msra.mxu0 %v272
    %1433 = vmatprep.subr.mxu0 %v269
    %1434 = vmatpush1.msra.mxu0 %v268
    %1435 = vmatprep.subr.mxu0 %v265
    %1436 = vmatpush1.msra.mxu0 %v264
    %1437 = vmatprep.subr.mxu0 %v261
    %1438 = vmatpush1.msra.mxu0 %v260
    %1439 = vmatprep.subr.mxu0 %v257
    %1440 = vmatpush1.msra.mxu0 %v256
    %1441 = vmatprep.subr.mxu0 %v253
    %1442 = vmatpush1.msra.mxu0 %v252
    %1443 = vmatprep.subr.mxu0 0.0
    %1444 = vmatpush2.msra.mxu0 0.0
    %1445 = vmatprep.subr.mxu0 0.0
    %1446 = vmatpush2.msra.mxu0 0.0
    %1447 = vmatprep.subr.mxu0 0.0
    %1448 = vmatpush2.msra.mxu0 0.0
    %1449 = vmatprep.subr.mxu0 0.0
    %1450 = vmatpush2.msra.mxu0 0.0
    %1451 = vmatprep.subr.mxu0 0.0
    %1452 = vmatpush2.msra.mxu0 0.0
    %1453 = vmatprep.subr.mxu0 0.0
    %1454 = vmatpush2.msra.mxu0 0.0
    %1455 = vmatprep.subr.mxu0 0.0
    %1456 = vmatpush2.msra.mxu0 0.0
    %1457 = vmatprep.subr.mxu0 0.0
    %1458 = vmatpush2.msra.mxu0 0.0
    %1459 = vmatprep.subr.mxu0 0.0
    %1460 = vmatpush2.msra.mxu0 0.0
    %1461 = vmatprep.subr.mxu0 0.0
    %1462 = vmatpush2.msra.mxu0 0.0
    %1463 = vmatprep.subr.mxu0 0.0
    %1464 = vmatpush2.msra.mxu0 0.0
    %1465 = vmatprep.subr.mxu0 0.0
    %1466 = vmatpush2.msra.mxu0 0.0
    %1467 = vmatprep.subr.mxu0 0.0
    %1468 = vmatpush2.msra.mxu0 0.0
    %1469 = vmatprep.subr.mxu0 0.0
    %1470 = vmatpush2.msra.mxu0 0.0
    %1471 = vmatprep.subr.mxu0 0.0
    %1472 = vmatpush2.msra.mxu0 0.0
    %1473 = vmatprep.subr.mxu0 0.0
    %1474 = vmatpush2.msra.mxu0 0.0
    %1475 = vmatprep.mubr.f32.mxu0 0.0
    %1476 = vmatmul.mubr.f32.gmra.mxu0 %v1409
    %v1477 = vpop.f32.mrf.mxu0
    %v1478 = vadd.f32 0.0, %v1477
    %v1479 = vpop.f32.mrf.mxu0
    %v1480 = vadd.f32 0.0, %v1479
    %1481 = vdwg.mxu0
    %1482 = vmatprep.subr.mxu0 %v315
    %1483 = vmatpush1.msra.mxu0 %v314
    %1484 = vmatprep.subr.mxu0 %v311
    %1485 = vmatpush1.msra.mxu0 %v310
    %1486 = vmatprep.subr.mxu0 %v307
    %1487 = vmatpush1.msra.mxu0 %v306
    %1488 = vmatprep.subr.mxu0 %v303
    %1489 = vmatpush1.msra.mxu0 %v302
    %1490 = vmatprep.subr.mxu0 %v299
    %1491 = vmatpush1.msra.mxu0 %v298
    %1492 = vmatprep.subr.mxu0 %v295
    %1493 = vmatpush1.msra.mxu0 %v294
    %1494 = vmatprep.subr.mxu0 %v291
    %1495 = vmatpush1.msra.mxu0 %v290
    %1496 = vmatprep.subr.mxu0 %v287
    %1497 = vmatpush1.msra.mxu0 %v286
    %1498 = vmatprep.subr.mxu0 %v283
    %1499 = vmatpush1.msra.mxu0 %v282
    %1500 = vmatprep.subr.mxu0 %v279
    %1501 = vmatpush1.msra.mxu0 %v278
    %1502 = vmatprep.subr.mxu0 %v275
    %1503 = vmatpush1.msra.mxu0 %v274
    %1504 = vmatprep.subr.mxu0 %v271
    %1505 = vmatpush1.msra.mxu0 %v270
    %1506 = vmatprep.subr.mxu0 %v267
    %1507 = vmatpush1.msra.mxu0 %v266
    %1508 = vmatprep.subr.mxu0 %v263
    %1509 = vmatpush1.msra.mxu0 %v262
    %1510 = vmatprep.subr.mxu0 %v259
    %1511 = vmatpush1.msra.mxu0 %v258
    %1512 = vmatprep.subr.mxu0 %v255
    %1513 = vmatpush1.msra.mxu0 %v254
    %1514 = vmatprep.subr.mxu0 0.0
    %1515 = vmatpush2.msra.mxu0 0.0
    %1516 = vmatprep.subr.mxu0 0.0
    %1517 = vmatpush2.msra.mxu0 0.0
    %1518 = vmatprep.subr.mxu0 0.0
    %1519 = vmatpush2.msra.mxu0 0.0
    %1520 = vmatprep.subr.mxu0 0.0
    %1521 = vmatpush2.msra.mxu0 0.0
    %1522 = vmatprep.subr.mxu0 0.0
    %1523 = vmatpush2.msra.mxu0 0.0
    %1524 = vmatprep.subr.mxu0 0.0
    %1525 = vmatpush2.msra.mxu0 0.0
    %1526 = vmatprep.subr.mxu0 0.0
    %1527 = vmatpush2.msra.mxu0 0.0
    %1528 = vmatprep.subr.mxu0 0.0
    %1529 = vmatpush2.msra.mxu0 0.0
    %1530 = vmatprep.subr.mxu0 0.0
    %1531 = vmatpush2.msra.mxu0 0.0
    %1532 = vmatprep.subr.mxu0 0.0
    %1533 = vmatpush2.msra.mxu0 0.0
    %1534 = vmatprep.subr.mxu0 0.0
    %1535 = vmatpush2.msra.mxu0 0.0
    %1536 = vmatprep.subr.mxu0 0.0
    %1537 = vmatpush2.msra.mxu0 0.0
    %1538 = vmatprep.subr.mxu0 0.0
    %1539 = vmatpush2.msra.mxu0 0.0
    %1540 = vmatprep.subr.mxu0 0.0
    %1541 = vmatpush2.msra.mxu0 0.0
    %1542 = vmatprep.subr.mxu0 0.0
    %1543 = vmatpush2.msra.mxu0 0.0
    %1544 = vmatprep.subr.mxu0 0.0
    %1545 = vmatpush2.msra.mxu0 0.0
    %1546 = vmatprep.mubr.f32.mxu0 0.0
    %1547 = vmatmul.mubr.f32.gmra.mxu0 %v1409
    %v1548 = vpop.f32.mrf.mxu0
    %v1549 = vadd.f32 0.0, %v1548
    %v1550 = vpop.f32.mrf.mxu0
    %v1551 = vadd.f32 0.0, %v1550
    %1552 = vdwg.mxu0
    %v1557 = vrot.slane %v1478, 4
    %v1558 = vrot.slane %v1480, 4
    %v1559 = vrot.slane %v1549, 4
    %v1560 = vrot.slane %v1551, 4
    %v1565 = vadd.f32 %v171, %v1557
    %v1566 = vadd.f32 %v173, %v1558
    %v1567 = vadd.f32 %v248, %v1559
    %v1568 = vadd.f32 %v250, %v1560
    %v1569 = vxor.u32 %v1565, 2147483648
    %v1570 = vmul.f32 %v1569, 1.442695
    %v1571 = vpow.pop %v1570
    %v1572 = vadd.f32 %v1571, 1.0
    %v1573 = vrcp.pop %v1572
    %v1574 = vmul.f32 1.0, %v1573
    %v1575 = vxor.u32 %v1566, 2147483648
    %v1576 = vmul.f32 %v1575, 1.442695
    %v1577 = vpow.pop %v1576
    %v1578 = vadd.f32 %v1577, 1.0
    %v1579 = vrcp.pop %v1578
    %v1580 = vmul.f32 1.0, %v1579
    %v1581 = vtanh.pop %v1567
    %v1582 = vxor.u32 %v1568, 2147483648
    %v1583 = vmul.f32 %v1582, 1.442695
    %v1584 = vpow.pop %v1583
    %v1585 = vadd.f32 %v1584, 1.0
    %v1586 = vrcp.pop %v1585
    %v1587 = vmul.f32 1.0, %v1586
    %v1589 = vrot.slane %v1405, 6
    %v1591 = vmul.f32 %v1580, %v1589
    %v1592 = vmul.f32 %v1574, %v1581
    %v1593 = vadd.f32 %v1591, %v1592
    %v1594 = vtanh.pop %v1593
    %v1595 = vmul.f32 %v1587, %v1594
    %v1597 = vrot.slane %v1595, 4
    %1599 = vmatprep.subr.mxu0 %v313
    %1600 = vmatpush1.msra.mxu0 %v312
    %1601 = vmatprep.subr.mxu0 %v309
    %1602 = vmatpush1.msra.mxu0 %v308
    %1603 = vmatprep.subr.mxu0 %v305
    %1604 = vmatpush1.msra.mxu0 %v304
    %1605 = vmatprep.subr.mxu0 %v301
    %1606 = vmatpush1.msra.mxu0 %v300
    %1607 = vmatprep.subr.mxu0 %v297
    %1608 = vmatpush1.msra.mxu0 %v296
    %1609 = vmatprep.subr.mxu0 %v293
    %1610 = vmatpush1.msra.mxu0 %v292
    %1611 = vmatprep.subr.mxu0 %v289
    %1612 = vmatpush1.msra.mxu0 %v288
    %1613 = vmatprep.subr.mxu0 %v285
    %1614 = vmatpush1.msra.mxu0 %v284
    %1615 = vmatprep.subr.mxu0 %v281
    %1616 = vmatpush1.msra.mxu0 %v280
    %1617 = vmatprep.subr.mxu0 %v277
    %1618 = vmatpush1.msra.mxu0 %v276
    %1619 = vmatprep.subr.mxu0 %v273
    %1620 = vmatpush1.msra.mxu0 %v272
    %1621 = vmatprep.subr.mxu0 %v269
    %1622 = vmatpush1.msra.mxu0 %v268
    %1623 = vmatprep.subr.mxu0 %v265
    %1624 = vmatpush1.msra.mxu0 %v264
    %1625 = vmatprep.subr.mxu0 %v261
    %1626 = vmatpush1.msra.mxu0 %v260
    %1627 = vmatprep.subr.mxu0 %v257
    %1628 = vmatpush1.msra.mxu0 %v256
    %1629 = vmatprep.subr.mxu0 %v253
    %1630 = vmatpush1.msra.mxu0 %v252
    %1631 = vmatprep.subr.mxu0 0.0
    %1632 = vmatpush2.msra.mxu0 0.0
    %1633 = vmatprep.subr.mxu0 0.0
    %1634 = vmatpush2.msra.mxu0 0.0
    %1635 = vmatprep.subr.mxu0 0.0
    %1636 = vmatpush2.msra.mxu0 0.0
    %1637 = vmatprep.subr.mxu0 0.0
    %1638 = vmatpush2.msra.mxu0 0.0
    %1639 = vmatprep.subr.mxu0 0.0
    %1640 = vmatpush2.msra.mxu0 0.0
    %1641 = vmatprep.subr.mxu0 0.0
    %1642 = vmatpush2.msra.mxu0 0.0
    %1643 = vmatprep.subr.mxu0 0.0
    %1644 = vmatpush2.msra.mxu0 0.0
    %1645 = vmatprep.subr.mxu0 0.0
    %1646 = vmatpush2.msra.mxu0 0.0
    %1647 = vmatprep.subr.mxu0 0.0
    %1648 = vmatpush2.msra.mxu0 0.0
    %1649 = vmatprep.subr.mxu0 0.0
    %1650 = vmatpush2.msra.mxu0 0.0
    %1651 = vmatprep.subr.mxu0 0.0
    %1652 = vmatpush2.msra.mxu0 0.0
    %1653 = vmatprep.subr.mxu0 0.0
    %1654 = vmatpush2.msra.mxu0 0.0
    %1655 = vmatprep.subr.mxu0 0.0
    %1656 = vmatpush2.msra.mxu0 0.0
    %1657 = vmatprep.subr.mxu0 0.0
    %1658 = vmatpush2.msra.mxu0 0.0
    %1659 = vmatprep.subr.mxu0 0.0
    %1660 = vmatpush2.msra.mxu0 0.0
    %1661 = vmatprep.subr.mxu0 0.0
    %1662 = vmatpush2.msra.mxu0 0.0
    %1663 = vmatprep.mubr.f32.mxu0 0.0
    %1664 = vmatmul.mubr.f32.gmra.mxu0 %v1597
    %v1665 = vpop.f32.mrf.mxu0
    %v1666 = vadd.f32 0.0, %v1665
    %v1667 = vpop.f32.mrf.mxu0
    %v1668 = vadd.f32 0.0, %v1667
    %1669 = vdwg.mxu0
    %1670 = vmatprep.subr.mxu0 %v315
    %1671 = vmatpush1.msra.mxu0 %v314
    %1672 = vmatprep.subr.mxu0 %v311
    %1673 = vmatpush1.msra.mxu0 %v310
    %1674 = vmatprep.subr.mxu0 %v307
    %1675 = vmatpush1.msra.mxu0 %v306
    %1676 = vmatprep.subr.mxu0 %v303
    %1677 = vmatpush1.msra.mxu0 %v302
    %1678 = vmatprep.subr.mxu0 %v299
    %1679 = vmatpush1.msra.mxu0 %v298
    %1680 = vmatprep.subr.mxu0 %v295
    %1681 = vmatpush1.msra.mxu0 %v294
    %1682 = vmatprep.subr.mxu0 %v291
    %1683 = vmatpush1.msra.mxu0 %v290
    %1684 = vmatprep.subr.mxu0 %v287
    %1685 = vmatpush1.msra.mxu0 %v286
    %1686 = vmatprep.subr.mxu0 %v283
    %1687 = vmatpush1.msra.mxu0 %v282
    %1688 = vmatprep.subr.mxu0 %v279
    %1689 = vmatpush1.msra.mxu0 %v278
    %1690 = vmatprep.subr.mxu0 %v275
    %1691 = vmatpush1.msra.mxu0 %v274
    %1692 = vmatprep.subr.mxu0 %v271
    %1693 = vmatpush1.msra.mxu0 %v270
    %1694 = vmatprep.subr.mxu0 %v267
    %1695 = vmatpush1.msra.mxu0 %v266
    %1696 = vmatprep.subr.mxu0 %v263
    %1697 = vmatpush1.msra.mxu0 %v262
    %1698 = vmatprep.subr.mxu0 %v259
    %1699 = vmatpush1.msra.mxu0 %v258
    %1700 = vmatprep.subr.mxu0 %v255
    %1701 = vmatpush1.msra.mxu0 %v254
    %1702 = vmatprep.subr.mxu0 0.0
    %1703 = vmatpush2.msra.mxu0 0.0
    %1704 = vmatprep.subr.mxu0 0.0
    %1705 = vmatpush2.msra.mxu0 0.0
    %1706 = vmatprep.subr.mxu0 0.0
    %1707 = vmatpush2.msra.mxu0 0.0
    %1708 = vmatprep.subr.mxu0 0.0
    %1709 = vmatpush2.msra.mxu0 0.0
    %1710 = vmatprep.subr.mxu0 0.0
    %1711 = vmatpush2.msra.mxu0 0.0
    %1712 = vmatprep.subr.mxu0 0.0
    %1713 = vmatpush2.msra.mxu0 0.0
    %1714 = vmatprep.subr.mxu0 0.0
    %1715 = vmatpush2.msra.mxu0 0.0
    %1716 = vmatprep.subr.mxu0 0.0
    %1717 = vmatpush2.msra.mxu0 0.0
    %1718 = vmatprep.subr.mxu0 0.0
    %1719 = vmatpush2.msra.mxu0 0.0
    %1720 = vmatprep.subr.mxu0 0.0
    %1721 = vmatpush2.msra.mxu0 0.0
    %1722 = vmatprep.subr.mxu0 0.0
    %1723 = vmatpush2.msra.mxu0 0.0
    %1724 = vmatprep.subr.mxu0 0.0
    %1725 = vmatpush2.msra.mxu0 0.0
    %1726 = vmatprep.subr.mxu0 0.0
    %1727 = vmatpush2.msra.mxu0 0.0
    %1728 = vmatprep.subr.mxu0 0.0
    %1729 = vmatpush2.msra.mxu0 0.0
    %1730 = vmatprep.subr.mxu0 0.0
    %1731 = vmatpush2.msra.mxu0 0.0
    %1732 = vmatprep.subr.mxu0 0.0
    %1733 = vmatpush2.msra.mxu0 0.0
    %1734 = vmatprep.mubr.f32.mxu0 0.0
    %1735 = vmatmul.mubr.f32.gmra.mxu0 %v1597
    %v1736 = vpop.f32.mrf.mxu0
    %v1737 = vadd.f32 0.0, %v1736
    %v1738 = vpop.f32.mrf.mxu0
    %v1739 = vadd.f32 0.0, %v1738
    %1740 = vdwg.mxu0
    %v1745 = vrot.slane %v1666, 2
    %v1746 = vrot.slane %v1668, 2
    %v1747 = vrot.slane %v1737, 2
    %v1748 = vrot.slane %v1739, 2
    %v1753 = vadd.f32 %v171, %v1745
    %v1754 = vadd.f32 %v173, %v1746
    %v1755 = vadd.f32 %v248, %v1747
    %v1756 = vadd.f32 %v250, %v1748
    %v1757 = vxor.u32 %v1753, 2147483648
    %v1758 = vmul.f32 %v1757, 1.442695
    %v1759 = vpow.pop %v1758
    %v1760 = vadd.f32 %v1759, 1.0
    %v1761 = vrcp.pop %v1760
    %v1762 = vmul.f32 1.0, %v1761
    %v1763 = vxor.u32 %v1754, 2147483648
    %v1764 = vmul.f32 %v1763, 1.442695
    %v1765 = vpow.pop %v1764
    %v1766 = vadd.f32 %v1765, 1.0
    %v1767 = vrcp.pop %v1766
    %v1768 = vmul.f32 1.0, %v1767
    %v1769 = vtanh.pop %v1755
    %v1770 = vxor.u32 %v1756, 2147483648
    %v1771 = vmul.f32 %v1770, 1.442695
    %v1772 = vpow.pop %v1771
    %v1773 = vadd.f32 %v1772, 1.0
    %v1774 = vrcp.pop %v1773
    %v1775 = vmul.f32 1.0, %v1774
    %v1777 = vrot.slane %v1593, 6
    %v1779 = vmul.f32 %v1768, %v1777
    %v1780 = vmul.f32 %v1762, %v1769
    %v1781 = vadd.f32 %v1779, %v1780
    %v1782 = vtanh.pop %v1781
    %v1783 = vmul.f32 %v1775, %v1782
    %v1784 = vld [vmem:[#allocation7] sm:$0xff]
    %v1785 = vld [vmem:[#allocation7 + $0x8] sm:$0xff]
    %v1786 = vld [vmem:[#allocation7 + $0x10] sm:$0xff]
    %v1787 = vld [vmem:[#allocation7 + $0x18] sm:$0xff]
    %v1788 = vld [vmem:[#allocation7 + $0x20] sm:$0xff]
    %v1789 = vld [vmem:[#allocation7 + $0x28] sm:$0xff]
    %v1790 = vld [vmem:[#allocation7 + $0x30] sm:$0xff]
    %v1791 = vld [vmem:[#allocation7 + $0x38] sm:$0xff]
    %v1792 = vld [vmem:[#allocation7 + $0x40] sm:$0xff]
    %v1793 = vld [vmem:[#allocation7 + $0x48] sm:$0xff]
    %v1794 = vld [vmem:[#allocation7 + $0x50] sm:$0xff]
    %v1795 = vld [vmem:[#allocation7 + $0x58] sm:$0xff]
    %v1796 = vld [vmem:[#allocation7 + $0x60] sm:$0xff]
    %v1797 = vld [vmem:[#allocation7 + $0x68] sm:$0xff]
    %v1798 = vld [vmem:[#allocation7 + $0x70] sm:$0xff]
    %v1799 = vld [vmem:[#allocation7 + $0x78] sm:$0xff]
    %v1800 = vld [vmem:[%s5] sm:$0x1]
    %v1802 = vlaneseq
    %v1803 = vshrl.u32 %v1802, 7
    %v1804 = vsub.s32 0, %v1803
    %v1805 = vrot.slane %v1800, %v1804
    %v1808 = vrot.slane %v1783, 6
    %1810 = vmatprep.subr.mxu0 0.0
    %1811 = vmatpush1.msra.mxu0 %v1799
    %1812 = vmatprep.subr.mxu0 0.0
    %1813 = vmatpush1.msra.mxu0 %v1798
    %1814 = vmatprep.subr.mxu0 0.0
    %1815 = vmatpush1.msra.mxu0 %v1797
    %1816 = vmatprep.subr.mxu0 0.0
    %1817 = vmatpush1.msra.mxu0 %v1796
    %1818 = vmatprep.subr.mxu0 0.0
    %1819 = vmatpush1.msra.mxu0 %v1795
    %1820 = vmatprep.subr.mxu0 0.0
    %1821 = vmatpush1.msra.mxu0 %v1794
    %1822 = vmatprep.subr.mxu0 0.0
    %1823 = vmatpush1.msra.mxu0 %v1793
    %1824 = vmatprep.subr.mxu0 0.0
    %1825 = vmatpush1.msra.mxu0 %v1792
    %1826 = vmatprep.subr.mxu0 0.0
    %1827 = vmatpush1.msra.mxu0 %v1791
    %1828 = vmatprep.subr.mxu0 0.0
    %1829 = vmatpush1.msra.mxu0 %v1790
    %1830 = vmatprep.subr.mxu0 0.0
    %1831 = vmatpush1.msra.mxu0 %v1789
    %1832 = vmatprep.subr.mxu0 0.0
    %1833 = vmatpush1.msra.mxu0 %v1788
    %1834 = vmatprep.subr.mxu0 0.0
    %1835 = vmatpush1.msra.mxu0 %v1787
    %1836 = vmatprep.subr.mxu0 0.0
    %1837 = vmatpush1.msra.mxu0 %v1786
    %1838 = vmatprep.subr.mxu0 0.0
    %1839 = vmatpush1.msra.mxu0 %v1785
    %1840 = vmatprep.subr.mxu0 0.0
    %1841 = vmatpush1.msra.mxu0 %v1784
    %1842 = vmatprep.subr.mxu0 0.0
    %1843 = vmatpush2.msra.mxu0 0.0
    %1844 = vmatprep.subr.mxu0 0.0
    %1845 = vmatpush2.msra.mxu0 0.0
    %1846 = vmatprep.subr.mxu0 0.0
    %1847 = vmatpush2.msra.mxu0 0.0
    %1848 = vmatprep.subr.mxu0 0.0
    %1849 = vmatpush2.msra.mxu0 0.0
    %1850 = vmatprep.subr.mxu0 0.0
    %1851 = vmatpush2.msra.mxu0 0.0
    %1852 = vmatprep.subr.mxu0 0.0
    %1853 = vmatpush2.msra.mxu0 0.0
    %1854 = vmatprep.subr.mxu0 0.0
    %1855 = vmatpush2.msra.mxu0 0.0
    %1856 = vmatprep.subr.mxu0 0.0
    %1857 = vmatpush2.msra.mxu0 0.0
    %1858 = vmatprep.subr.mxu0 0.0
    %1859 = vmatpush2.msra.mxu0 0.0
    %1860 = vmatprep.subr.mxu0 0.0
    %1861 = vmatpush2.msra.mxu0 0.0
    %1862 = vmatprep.subr.mxu0 0.0
    %1863 = vmatpush2.msra.mxu0 0.0
    %1864 = vmatprep.subr.mxu0 0.0
    %1865 = vmatpush2.msra.mxu0 0.0
    %1866 = vmatprep.subr.mxu0 0.0
    %1867 = vmatpush2.msra.mxu0 0.0
    %1868 = vmatprep.subr.mxu0 0.0
    %1869 = vmatpush2.msra.mxu0 0.0
    %1870 = vmatprep.subr.mxu0 0.0
    %1871 = vmatpush2.msra.mxu0 0.0
    %1872 = vmatprep.subr.mxu0 0.0
    %1873 = vmatpush2.msra.mxu0 0.0
    %1874 = vmatprep.mubr.f32.mxu0 0.0
    %1875 = vmatmul.mubr.f32.gmra.mxu0 %v1808
    %v1876 = vpop.f32.mrf.mxu0
    %v1877 = vadd.f32 %v1805, %v1876
    %v1878 = vpop.f32.mrf.mxu0
    %1879 = vdwg.mxu0
    %1880 = vst [vmem:[#allocation8] sm:$0x3] %v1877
    // Predicated region
    $region38: #{tpu_custom_call.1} parent=1 // pred_check
      _
    $region39: #{tpu_custom_call.1} parent=1 // pred_check_branch
      %1882 = sbr.rel (0) target = $region41
    $region40: #{tpu_custom_call.1} parent=1 // pred_region
      %s1884 = ssub.s32 32, 32
      %1885 = vsyncadd [#allocation4], %s1884
      %s1887 = sshll.u32 [#allocation8], 4
      %s1888 = int_to_ptr.vmem [resolvable:$true] %s1887
      %1890 = dma.vmem_to_hbm [thread:$0]  %s1888, 32, %s6, [#allocation4]
    $region41: #{tpu_custom_call.1} parent=1 // pred_fallthru
      _
    // Predicated region
    $region42: #{tpu_custom_call.1} parent=1 // pred_check
      _
    $region43: #{tpu_custom_call.1} parent=1 // pred_check_branch
      %1892 = sbr.rel (0) target = $region45
    $region44: #{tpu_custom_call.1} parent=1 // pred_region
      %1893 = dma.done [#allocation4], 32
    $region45: #{tpu_custom_call.1} parent=1 // pred_fallthru
      _
    %1894 = vsyncpa [#allocation3], 1
    %1895 = vsyncpa [#allocation6], 1
    %1896 = vsyncpa [#allocation4], 1

</llo_original>
